<compile_context>
chip_gen: v7x
topology: tpu7x:2x2x1
jax: 0.10.0
libtpu: 0.0.40
codegen_flags: <defaults>
</compile_context>

<pallas_src>
import functools

import jax
import jax.numpy as jnp
from jax import lax
from jax.experimental import pallas as pl
from jax.experimental.pallas import tpu as pltpu  # noqa: F401  (TPU backend import)

_UNROLL_MAX_STEPS = 16  # fully unroll the recurrence up to this many steps


def _gru_kernel(noise_ref, w_hc_ref, b_hc_ref, w_i_ref, b_in_ref,
                w_hf_ref, b_hf_ref, samples_ref, hiddens_ref):
    """Whole GRU-generator forward pass in one invocation (no grid).

    noise_ref   : (B, H)
    w_hc_ref    : (H, C)        b_hc_ref : (1, C)       -- hidden2codes head (t = 0 only)
    w_i_ref     : (C, 3H)       b_in_ref : (1, H)       -- fused [r|z|n] input weights; only
                                                           the n-gate input bias stays separate
    w_hf_ref    : (H, 3H + C)   b_hf_ref : (1, 3H + C)  -- fused [Whr|Whz|Whn|Whc]; bias rows
                                                           are [b_hr+b_ir | b_hz+b_iz | b_hn | b_hc]
    samples_ref : (B, max_len*C)   hiddens_ref : (B, max_len*H)   (flat, lane-contiguous)
    """
    B, H = noise_ref.shape
    C = w_hc_ref.shape[1]
    H3 = 3 * H
    max_len = samples_ref.shape[1] // C

    # Hoisted bias broadcasts (done once, not per unrolled step).
    b_in = jnp.broadcast_to(b_in_ref[...], (B, H))
    b_hf = jnp.broadcast_to(b_hf_ref[...], (B, H3 + C))

    def cell(codes, h, gh):
        # One MXU issue: gi = codes @ [Wir|Wiz|Win].  The r/z input biases are pre-folded
        # into the fused hidden bias, so only b_in is added here (for the n gate).
        gi = jnp.dot(codes, w_i_ref[...], preferred_element_type=jnp.float32)
        rz = jax.nn.sigmoid(gi[:, :2 * H] + gh[:, :2 * H])      # packed r|z sigmoid
        r = rz[:, :H]
        z = rz[:, H:]
        n = jnp.tanh(gi[:, 2 * H:] + b_in + r * gh[:, 2 * H:])  # bias inside r-scaled term
        return (1.0 - z) * n + z * h

    def fused_hidden(h):
        # One MXU issue: h @ [Whr|Whz|Whn|Whc] -> next step's hidden gate pre-activations
        # AND the hidden2codes head logits (codes for the next step) in the last C lanes.
        full = jnp.dot(h, w_hf_ref[...], preferred_element_type=jnp.float32) + b_hf
        return jax.nn.sigmoid(full[:, H3:]), full[:, :H3]

    # t = 0: codes_0 = sigmoid(noise @ W_hc + b_hc); h_0 = 0 so gh_0 is pure bias (no matmul).
    codes = jax.nn.sigmoid(
        jnp.dot(noise_ref[...], w_hc_ref[...], preferred_element_type=jnp.float32)
        + b_hc_ref[...])
    h = jnp.zeros((B, H), jnp.float32)
    gh = b_hf[:, :H3]

    if max_len <= _UNROLL_MAX_STEPS:
        # Static unroll: static lane-offset stores, full LLO scheduling visibility.
        for t in range(max_len):
            samples_ref[:, t * C:(t + 1) * C] = codes            # samples[t] = codes_t
            h = cell(codes, h, gh)                                # h_{t+1}
            hiddens_ref[:, t * H:(t + 1) * H] = h                 # hiddens[t] = h_{t+1}
            if t + 1 < max_len:
                codes, gh = fused_hidden(h)                       # codes_{t+1}, gh_{t+1}
    else:
        # Long sequences: fori_loop keeps program size and vreg live ranges flat.
        def body(t, carry):
            codes_t, h_t, gh_t = carry
            off_c = pl.multiple_of(t * C, C)
            off_h = pl.multiple_of(t * H, H)
            samples_ref[:, pl.ds(off_c, C)] = codes_t
            h_new = cell(codes_t, h_t, gh_t)
            hiddens_ref[:, pl.ds(off_h, H)] = h_new
            codes_new, gh_new = fused_hidden(h_new)   # last iteration's result is unused
            return codes_new, h_new, gh_new

        lax.fori_loop(0, max_len, body, (codes, h, gh), unroll=False)


@functools.partial(jax.jit, static_argnames=("max_len",))
def gru_forward(noise, params, *, max_len):
    """params hold (in, out)-layout weight matrices and (1, out) bias rows."""
    B, H = noise.shape
    C = params["w_hc"].shape[1]

    # Fuse per-gate input weights once: (C, 3H).
    w_i = jnp.concatenate([params["w_ir"], params["w_iz"], params["w_in"]], axis=1)
    # Fuse hidden gate weights WITH the hidden2codes head weight: (H, 3H + C), so the
    # recurrence does a single h-matmul per step.  r/z input biases are pre-summed here.
    w_hf = jnp.concatenate(
        [params["w_hr"], params["w_hz"], params["w_hn"], params["w_hc"]], axis=1)
    b_hf = jnp.concatenate(
        [params["b_hr"] + params["b_ir"],
         params["b_hz"] + params["b_iz"],
         params["b_hn"], params["b_hc"]], axis=1)

    # Single invocation, no grid: every operand / output is a whole-array VMEM resident and
    # each output is written back to HBM with one dense DMA at kernel end.
    # TODO(synk): for large B on v7x, add a batch-parallel grid axis
    #   (dimension_semantics=("parallel",)) to engage both TensorCores; for large
    #   B*max_len*H, time-chunk the output BlockSpecs (h carried in VMEM scratch) and set
    #   vmem_limit_bytes explicitly for v7x's 64 MiB VMEM.
    # TODO(synk): for large hidden_dim on v6e/v7x, store w_i / w_hf in bf16 (keep f32 accum).
    samples_flat, hiddens_flat = pl.pallas_call(
        _gru_kernel,
        out_shape=(
            jax.ShapeDtypeStruct((B, max_len * C), jnp.float32),
            jax.ShapeDtypeStruct((B, max_len * H), jnp.float32),
        ),
    )(noise, params["w_hc"], params["b_hc"], w_i, params["b_in"], w_hf, b_hf)

    # Row-major flat -> (B, max_len, F) is a pure metadata reshape (no transpose / copy).
    return (samples_flat.reshape(B, max_len, C),
            hiddens_flat.reshape(B, max_len, H))


def init_params(key, code_num, hidden_dim):
    """Deterministic synthetic init (PyTorch-style uniform bounds)."""
    ks = jax.random.split(key, 16)
    bound_gru = 1.0 / jnp.sqrt(hidden_dim)
    bound_lin = 1.0 / jnp.sqrt(hidden_dim)   # Linear(hidden_dim -> code_num)

    def u(k, shape, bound):
        return jax.random.uniform(k, shape, jnp.float32, -bound, bound)

    params = {
        # hidden2codes: Linear(hidden_dim, code_num), stored (in, out)
        "w_hc": u(ks[0], (hidden_dim, code_num), bound_lin),
        "b_hc": u(ks[1], (1, code_num), bound_lin),
        # GRUCell input weights: PyTorch weight_ih is (3H, C); stored transposed per gate
        "w_ir": u(ks[2], (code_num, hidden_dim), bound_gru),
        "w_iz": u(ks[3], (code_num, hidden_dim), bound_gru),
        "w_in": u(ks[4], (code_num, hidden_dim), bound_gru),
        # GRUCell hidden weights: (H, H) per gate
        "w_hr": u(ks[5], (hidden_dim, hidden_dim), bound_gru),
        "w_hz": u(ks[6], (hidden_dim, hidden_dim), bound_gru),
        "w_hn": u(ks[7], (hidden_dim, hidden_dim), bound_gru),
        # biases kept as (1, H) rows so they broadcast over batch
        "b_ir": u(ks[8], (1, hidden_dim), bound_gru),
        "b_iz": u(ks[9], (1, hidden_dim), bound_gru),
        "b_in": u(ks[10], (1, hidden_dim), bound_gru),
        "b_hr": u(ks[11], (1, hidden_dim), bound_gru),
        "b_hz": u(ks[12], (1, hidden_dim), bound_gru),
        "b_hn": u(ks[13], (1, hidden_dim), bound_gru),
    }
    return params


def gru_forward_ref(noise, params, *, max_len):
    """Pure-JAX reference (mirrors the PyTorch module) for sanity-checking the kernel."""
    def head(h):
        return jax.nn.sigmoid(h @ params["w_hc"] + params["b_hc"])

    codes = head(noise)
    h = jnp.zeros((noise.shape[0], params["w_hr"].shape[0]), jnp.float32)
    samples, hiddens = [], []
    for _ in range(max_len):
        samples.append(codes)
        r = jax.nn.sigmoid(codes @ params["w_ir"] + params["b_ir"]
                           + h @ params["w_hr"] + params["b_hr"])
        z = jax.nn.sigmoid(codes @ params["w_iz"] + params["b_iz"]
                           + h @ params["w_hz"] + params["b_hz"])
        n = jnp.tanh(codes @ params["w_in"] + params["b_in"]
                     + r * (h @ params["w_hn"] + params["b_hn"]))
        h = (1.0 - z) * n + z * h
        codes = head(h)
        hiddens.append(h)
    return jnp.stack(samples, axis=1), jnp.stack(hiddens, axis=1)


if __name__ == "__main__":
    B, code_num, hidden_dim, max_len = 2, 4, 32, 8

    key = jax.random.PRNGKey(0)
    k_params, k_noise = jax.random.split(key)
    params = init_params(k_params, code_num, hidden_dim)
    noise = jax.random.normal(k_noise, (B, hidden_dim), jnp.float32)

    samples, hiddens = gru_forward(noise, params, max_len=max_len)
    samples = jax.block_until_ready(samples)
    hiddens = jax.block_until_ready(hiddens)

    # sanity check against pure-JAX reference
    s_ref, h_ref = gru_forward_ref(noise, params, max_len=max_len)
    assert samples.shape == (B, max_len, code_num)
    assert hiddens.shape == (B, max_len, hidden_dim)
    assert jnp.allclose(samples, s_ref, atol=1e-5), "samples mismatch"
    assert jnp.allclose(hiddens, h_ref, atol=1e-5), "hiddens mismatch"

    print("KERNEL_OK")
</pallas_src>

<mosaic_0001>
module attributes {stable_mosaic.version = 11 : i64} {
  func.func @_gru_kernel(%arg0: memref<2x32xf32, #tpu.memory_space<vmem>>, %arg1: memref<32x4xf32, #tpu.memory_space<vmem>>, %arg2: memref<1x4xf32, #tpu.memory_space<vmem>>, %arg3: memref<4x96xf32, #tpu.memory_space<vmem>>, %arg4: memref<1x32xf32, #tpu.memory_space<vmem>>, %arg5: memref<32x100xf32, #tpu.memory_space<vmem>>, %arg6: memref<1x100xf32, #tpu.memory_space<vmem>>, %arg7: memref<2x32xf32, #tpu.memory_space<vmem>>, %arg8: memref<2x256xf32, #tpu.memory_space<vmem>>) attributes {dimension_semantics = [], scalar_prefetch = 0 : i64, scratch_operands = 0 : i64, tpu.core_type = #tpu.core_type<tc>} {
    %c0 = arith.constant 0 : index
    %c0_0 = arith.constant 0 : index
    %0 = vector.load %arg4[%c0, %c0_0] : memref<1x32xf32, #tpu.memory_space<vmem>>, vector<1x32xf32>
    %1 = vector.shape_cast %0 : vector<1x32xf32> to vector<1x32xf32>
    %2 = vector.broadcast %1 : vector<1x32xf32> to vector<2x32xf32>
    %c0_1 = arith.constant 0 : index
    %c0_2 = arith.constant 0 : index
    %3 = vector.load %arg6[%c0_1, %c0_2] : memref<1x100xf32, #tpu.memory_space<vmem>>, vector<1x100xf32>
    %4 = vector.shape_cast %3 : vector<1x100xf32> to vector<1x100xf32>
    %5 = vector.broadcast %4 : vector<1x100xf32> to vector<2x100xf32>
    %c0_3 = arith.constant 0 : index
    %c0_4 = arith.constant 0 : index
    %6 = vector.load %arg0[%c0_3, %c0_4] : memref<2x32xf32, #tpu.memory_space<vmem>>, vector<2x32xf32>
    %c0_5 = arith.constant 0 : index
    %c0_6 = arith.constant 0 : index
    %7 = vector.load %arg1[%c0_5, %c0_6] : memref<32x4xf32, #tpu.memory_space<vmem>>, vector<32x4xf32>
    %cst = arith.constant dense<0.000000e+00> : vector<2x4xf32>
    %8 = tpu.matmul %6, %7, %cst {dimension_numbers = #tpu.dot_dimension_numbers<[1], [0], [0], [1], [0, 0, 1, 1], [], []>} : vector<2x32xf32>, vector<32x4xf32>, vector<2x4xf32> -> vector<2x4xf32>
    %c0_7 = arith.constant 0 : index
    %c0_8 = arith.constant 0 : index
    %9 = vector.load %arg2[%c0_7, %c0_8] : memref<1x4xf32, #tpu.memory_space<vmem>>, vector<1x4xf32>
    %10 = vector.broadcast %9 : vector<1x4xf32> to vector<2x4xf32>
    %11 = arith.addf %8, %10 : vector<2x4xf32>
    %12 = arith.negf %11 : vector<2x4xf32>
    %13 = math.exp %12 : vector<2x4xf32>
    %cst_9 = arith.constant 1.000000e+00 : f32
    %14 = vector.broadcast %cst_9 : f32 to vector<2x4xf32>
    %15 = arith.addf %14, %13 : vector<2x4xf32>
    %16 = arith.divf %14, %15 : vector<2x4xf32>
    %cst_10 = arith.constant 0.000000e+00 : f32
    %17 = vector.broadcast %cst_10 : f32 to vector<2x32xf32>
    %18 = vector.extract_strided_slice %5 {offsets = [0, 0], sizes = [2, 96], strides = [1, 1]} : vector<2x100xf32> to vector<2x96xf32>
    %c0_11 = arith.constant 0 : index
    %c0_12 = arith.constant 0 : index
    %19 = vector.load %arg7[%c0_11, %c0_12] : memref<2x32xf32, #tpu.memory_space<vmem>>, vector<2x4xf32>
    tpu.vector_store %arg7[%c0_11, %c0_12], %16 {strides = array<i32>} : memref<2x32xf32, #tpu.memory_space<vmem>>, vector<2x4xf32>,
    %c0_13 = arith.constant 0 : index
    %c0_14 = arith.constant 0 : index
    %20 = vector.load %arg3[%c0_13, %c0_14] : memref<4x96xf32, #tpu.memory_space<vmem>>, vector<4x96xf32>
    %cst_15 = arith.constant dense<0.000000e+00> : vector<2x96xf32>
    %21 = tpu.matmul %16, %20, %cst_15 {dimension_numbers = #tpu.dot_dimension_numbers<[1], [0], [0], [1], [0, 0, 1, 1], [], []>} : vector<2x4xf32>, vector<4x96xf32>, vector<2x96xf32> -> vector<2x96xf32>
    %22 = vector.extract_strided_slice %21 {offsets = [0, 0], sizes = [2, 64], strides = [1, 1]} : vector<2x96xf32> to vector<2x64xf32>
    %23 = vector.extract_strided_slice %18 {offsets = [0, 0], sizes = [2, 64], strides = [1, 1]} : vector<2x96xf32> to vector<2x64xf32>
    %24 = arith.addf %22, %23 : vector<2x64xf32>
    %25 = arith.negf %24 : vector<2x64xf32>
    %26 = math.exp %25 : vector<2x64xf32>
    %cst_16 = arith.constant 1.000000e+00 : f32
    %27 = vector.broadcast %cst_16 : f32 to vector<2x64xf32>
    %28 = arith.addf %27, %26 : vector<2x64xf32>
    %29 = arith.divf %27, %28 : vector<2x64xf32>
    %30 = vector.extract_strided_slice %29 {offsets = [0, 0], sizes = [2, 32], strides = [1, 1]} : vector<2x64xf32> to vector<2x32xf32>
    %31 = vector.extract_strided_slice %29 {offsets = [0, 32], sizes = [2, 32], strides = [1, 1]} : vector<2x64xf32> to vector<2x32xf32>
    %32 = vector.extract_strided_slice %21 {offsets = [0, 64], sizes = [2, 32], strides = [1, 1]} : vector<2x96xf32> to vector<2x32xf32>
    %33 = arith.addf %32, %2 : vector<2x32xf32>
    %34 = vector.extract_strided_slice %18 {offsets = [0, 64], sizes = [2, 32], strides = [1, 1]} : vector<2x96xf32> to vector<2x32xf32>
    %35 = arith.mulf %30, %34 : vector<2x32xf32>
    %36 = arith.addf %33, %35 : vector<2x32xf32>
    %37 = math.tanh %36 : vector<2x32xf32>
    %cst_17 = arith.constant 1.000000e+00 : f32
    %38 = vector.broadcast %cst_17 : f32 to vector<2x32xf32>
    %39 = arith.subf %38, %31 : vector<2x32xf32>
    %40 = arith.mulf %39, %37 : vector<2x32xf32>
    %41 = arith.mulf %31, %17 : vector<2x32xf32>
    %42 = arith.addf %40, %41 : vector<2x32xf32>
    %c0_18 = arith.constant 0 : index
    %c0_19 = arith.constant 0 : index
    %43 = vector.load %arg8[%c0_18, %c0_19] : memref<2x256xf32, #tpu.memory_space<vmem>>, vector<2x32xf32>
    tpu.vector_store %arg8[%c0_18, %c0_19], %42 {strides = array<i32>} : memref<2x256xf32, #tpu.memory_space<vmem>>, vector<2x32xf32>,
    %c0_20 = arith.constant 0 : index
    %c0_21 = arith.constant 0 : index
    %44 = vector.load %arg5[%c0_20, %c0_21] : memref<32x100xf32, #tpu.memory_space<vmem>>, vector<32x100xf32>
    %cst_22 = arith.constant dense<0.000000e+00> : vector<2x100xf32>
    %45 = tpu.matmul %42, %44, %cst_22 {dimension_numbers = #tpu.dot_dimension_numbers<[1], [0], [0], [1], [0, 0, 1, 1], [], []>} : vector<2x32xf32>, vector<32x100xf32>, vector<2x100xf32> -> vector<2x100xf32>
    %46 = arith.addf %45, %5 : vector<2x100xf32>
    %47 = vector.extract_strided_slice %46 {offsets = [0, 96], sizes = [2, 4], strides = [1, 1]} : vector<2x100xf32> to vector<2x4xf32>
    %48 = arith.negf %47 : vector<2x4xf32>
    %49 = math.exp %48 : vector<2x4xf32>
    %cst_23 = arith.constant 1.000000e+00 : f32
    %50 = vector.broadcast %cst_23 : f32 to vector<2x4xf32>
    %51 = arith.addf %50, %49 : vector<2x4xf32>
    %52 = arith.divf %50, %51 : vector<2x4xf32>
    %53 = vector.extract_strided_slice %46 {offsets = [0, 0], sizes = [2, 96], strides = [1, 1]} : vector<2x100xf32> to vector<2x96xf32>
    %c0_24 = arith.constant 0 : index
    %c4 = arith.constant 4 : index
    %54 = vector.load %arg7[%c0_24, %c4] : memref<2x32xf32, #tpu.memory_space<vmem>>, vector<2x4xf32>
    tpu.vector_store %arg7[%c0_24, %c4], %52 {strides = array<i32>} : memref<2x32xf32, #tpu.memory_space<vmem>>, vector<2x4xf32>,
    %c0_25 = arith.constant 0 : index
    %c0_26 = arith.constant 0 : index
    %55 = vector.load %arg3[%c0_25, %c0_26] : memref<4x96xf32, #tpu.memory_space<vmem>>, vector<4x96xf32>
    %cst_27 = arith.constant dense<0.000000e+00> : vector<2x96xf32>
    %56 = tpu.matmul %52, %55, %cst_27 {dimension_numbers = #tpu.dot_dimension_numbers<[1], [0], [0], [1], [0, 0, 1, 1], [], []>} : vector<2x4xf32>, vector<4x96xf32>, vector<2x96xf32> -> vector<2x96xf32>
    %57 = vector.extract_strided_slice %56 {offsets = [0, 0], sizes = [2, 64], strides = [1, 1]} : vector<2x96xf32> to vector<2x64xf32>
    %58 = vector.extract_strided_slice %53 {offsets = [0, 0], sizes = [2, 64], strides = [1, 1]} : vector<2x96xf32> to vector<2x64xf32>
    %59 = arith.addf %57, %58 : vector<2x64xf32>
    %60 = arith.negf %59 : vector<2x64xf32>
    %61 = math.exp %60 : vector<2x64xf32>
    %cst_28 = arith.constant 1.000000e+00 : f32
    %62 = vector.broadcast %cst_28 : f32 to vector<2x64xf32>
    %63 = arith.addf %62, %61 : vector<2x64xf32>
    %64 = arith.divf %62, %63 : vector<2x64xf32>
    %65 = vector.extract_strided_slice %64 {offsets = [0, 0], sizes = [2, 32], strides = [1, 1]} : vector<2x64xf32> to vector<2x32xf32>
    %66 = vector.extract_strided_slice %64 {offsets = [0, 32], sizes = [2, 32], strides = [1, 1]} : vector<2x64xf32> to vector<2x32xf32>
    %67 = vector.extract_strided_slice %56 {offsets = [0, 64], sizes = [2, 32], strides = [1, 1]} : vector<2x96xf32> to vector<2x32xf32>
    %68 = arith.addf %67, %2 : vector<2x32xf32>
    %69 = vector.extract_strided_slice %53 {offsets = [0, 64], sizes = [2, 32], strides = [1, 1]} : vector<2x96xf32> to vector<2x32xf32>
    %70 = arith.mulf %65, %69 : vector<2x32xf32>
    %71 = arith.addf %68, %70 : vector<2x32xf32>
    %72 = math.tanh %71 : vector<2x32xf32>
    %cst_29 = arith.constant 1.000000e+00 : f32
    %73 = vector.broadcast %cst_29 : f32 to vector<2x32xf32>
    %74 = arith.subf %73, %66 : vector<2x32xf32>
    %75 = arith.mulf %74, %72 : vector<2x32xf32>
    %76 = arith.mulf %66, %42 : vector<2x32xf32>
    %77 = arith.addf %75, %76 : vector<2x32xf32>
    %c0_30 = arith.constant 0 : index
    %c32 = arith.constant 32 : index
    %78 = vector.load %arg8[%c0_30, %c32] : memref<2x256xf32, #tpu.memory_space<vmem>>, vector<2x32xf32>
    tpu.vector_store %arg8[%c0_30, %c32], %77 {strides = array<i32>} : memref<2x256xf32, #tpu.memory_space<vmem>>, vector<2x32xf32>,
    %c0_31 = arith.constant 0 : index
    %c0_32 = arith.constant 0 : index
    %79 = vector.load %arg5[%c0_31, %c0_32] : memref<32x100xf32, #tpu.memory_space<vmem>>, vector<32x100xf32>
    %cst_33 = arith.constant dense<0.000000e+00> : vector<2x100xf32>
    %80 = tpu.matmul %77, %79, %cst_33 {dimension_numbers = #tpu.dot_dimension_numbers<[1], [0], [0], [1], [0, 0, 1, 1], [], []>} : vector<2x32xf32>, vector<32x100xf32>, vector<2x100xf32> -> vector<2x100xf32>
    %81 = arith.addf %80, %5 : vector<2x100xf32>
    %82 = vector.extract_strided_slice %81 {offsets = [0, 96], sizes = [2, 4], strides = [1, 1]} : vector<2x100xf32> to vector<2x4xf32>
    %83 = arith.negf %82 : vector<2x4xf32>
    %84 = math.exp %83 : vector<2x4xf32>
    %cst_34 = arith.constant 1.000000e+00 : f32
    %85 = vector.broadcast %cst_34 : f32 to vector<2x4xf32>
    %86 = arith.addf %85, %84 : vector<2x4xf32>
    %87 = arith.divf %85, %86 : vector<2x4xf32>
    %88 = vector.extract_strided_slice %81 {offsets = [0, 0], sizes = [2, 96], strides = [1, 1]} : vector<2x100xf32> to vector<2x96xf32>
    %c0_35 = arith.constant 0 : index
    %c8 = arith.constant 8 : index
    %89 = vector.load %arg7[%c0_35, %c8] : memref<2x32xf32, #tpu.memory_space<vmem>>, vector<2x4xf32>
    tpu.vector_store %arg7[%c0_35, %c8], %87 {strides = array<i32>} : memref<2x32xf32, #tpu.memory_space<vmem>>, vector<2x4xf32>,
    %c0_36 = arith.constant 0 : index
    %c0_37 = arith.constant 0 : index
    %90 = vector.load %arg3[%c0_36, %c0_37] : memref<4x96xf32, #tpu.memory_space<vmem>>, vector<4x96xf32>
    %cst_38 = arith.constant dense<0.000000e+00> : vector<2x96xf32>
    %91 = tpu.matmul %87, %90, %cst_38 {dimension_numbers = #tpu.dot_dimension_numbers<[1], [0], [0], [1], [0, 0, 1, 1], [], []>} : vector<2x4xf32>, vector<4x96xf32>, vector<2x96xf32> -> vector<2x96xf32>
    %92 = vector.extract_strided_slice %91 {offsets = [0, 0], sizes = [2, 64], strides = [1, 1]} : vector<2x96xf32> to vector<2x64xf32>
    %93 = vector.extract_strided_slice %88 {offsets = [0, 0], sizes = [2, 64], strides = [1, 1]} : vector<2x96xf32> to vector<2x64xf32>
    %94 = arith.addf %92, %93 : vector<2x64xf32>
    %95 = arith.negf %94 : vector<2x64xf32>
    %96 = math.exp %95 : vector<2x64xf32>
    %cst_39 = arith.constant 1.000000e+00 : f32
    %97 = vector.broadcast %cst_39 : f32 to vector<2x64xf32>
    %98 = arith.addf %97, %96 : vector<2x64xf32>
    %99 = arith.divf %97, %98 : vector<2x64xf32>
    %100 = vector.extract_strided_slice %99 {offsets = [0, 0], sizes = [2, 32], strides = [1, 1]} : vector<2x64xf32> to vector<2x32xf32>
    %101 = vector.extract_strided_slice %99 {offsets = [0, 32], sizes = [2, 32], strides = [1, 1]} : vector<2x64xf32> to vector<2x32xf32>
    %102 = vector.extract_strided_slice %91 {offsets = [0, 64], sizes = [2, 32], strides = [1, 1]} : vector<2x96xf32> to vector<2x32xf32>
    %103 = arith.addf %102, %2 : vector<2x32xf32>
    %104 = vector.extract_strided_slice %88 {offsets = [0, 64], sizes = [2, 32], strides = [1, 1]} : vector<2x96xf32> to vector<2x32xf32>
    %105 = arith.mulf %100, %104 : vector<2x32xf32>
    %106 = arith.addf %103, %105 : vector<2x32xf32>
    %107 = math.tanh %106 : vector<2x32xf32>
    %cst_40 = arith.constant 1.000000e+00 : f32
    %108 = vector.broadcast %cst_40 : f32 to vector<2x32xf32>
    %109 = arith.subf %108, %101 : vector<2x32xf32>
    %110 = arith.mulf %109, %107 : vector<2x32xf32>
    %111 = arith.mulf %101, %77 : vector<2x32xf32>
    %112 = arith.addf %110, %111 : vector<2x32xf32>
    %c0_41 = arith.constant 0 : index
    %c64 = arith.constant 64 : index
    %113 = vector.load %arg8[%c0_41, %c64] : memref<2x256xf32, #tpu.memory_space<vmem>>, vector<2x32xf32>
    tpu.vector_store %arg8[%c0_41, %c64], %112 {strides = array<i32>} : memref<2x256xf32, #tpu.memory_space<vmem>>, vector<2x32xf32>,
    %c0_42 = arith.constant 0 : index
    %c0_43 = arith.constant 0 : index
    %114 = vector.load %arg5[%c0_42, %c0_43] : memref<32x100xf32, #tpu.memory_space<vmem>>, vector<32x100xf32>
    %cst_44 = arith.constant dense<0.000000e+00> : vector<2x100xf32>
    %115 = tpu.matmul %112, %114, %cst_44 {dimension_numbers = #tpu.dot_dimension_numbers<[1], [0], [0], [1], [0, 0, 1, 1], [], []>} : vector<2x32xf32>, vector<32x100xf32>, vector<2x100xf32> -> vector<2x100xf32>
    %116 = arith.addf %115, %5 : vector<2x100xf32>
    %117 = vector.extract_strided_slice %116 {offsets = [0, 96], sizes = [2, 4], strides = [1, 1]} : vector<2x100xf32> to vector<2x4xf32>
    %118 = arith.negf %117 : vector<2x4xf32>
    %119 = math.exp %118 : vector<2x4xf32>
    %cst_45 = arith.constant 1.000000e+00 : f32
    %120 = vector.broadcast %cst_45 : f32 to vector<2x4xf32>
    %121 = arith.addf %120, %119 : vector<2x4xf32>
    %122 = arith.divf %120, %121 : vector<2x4xf32>
    %123 = vector.extract_strided_slice %116 {offsets = [0, 0], sizes = [2, 96], strides = [1, 1]} : vector<2x100xf32> to vector<2x96xf32>
    %c0_46 = arith.constant 0 : index
    %c12 = arith.constant 12 : index
    %124 = vector.load %arg7[%c0_46, %c12] : memref<2x32xf32, #tpu.memory_space<vmem>>, vector<2x4xf32>
    tpu.vector_store %arg7[%c0_46, %c12], %122 {strides = array<i32>} : memref<2x32xf32, #tpu.memory_space<vmem>>, vector<2x4xf32>,
    %c0_47 = arith.constant 0 : index
    %c0_48 = arith.constant 0 : index
    %125 = vector.load %arg3[%c0_47, %c0_48] : memref<4x96xf32, #tpu.memory_space<vmem>>, vector<4x96xf32>
    %cst_49 = arith.constant dense<0.000000e+00> : vector<2x96xf32>
    %126 = tpu.matmul %122, %125, %cst_49 {dimension_numbers = #tpu.dot_dimension_numbers<[1], [0], [0], [1], [0, 0, 1, 1], [], []>} : vector<2x4xf32>, vector<4x96xf32>, vector<2x96xf32> -> vector<2x96xf32>
    %127 = vector.extract_strided_slice %126 {offsets = [0, 0], sizes = [2, 64], strides = [1, 1]} : vector<2x96xf32> to vector<2x64xf32>
    %128 = vector.extract_strided_slice %123 {offsets = [0, 0], sizes = [2, 64], strides = [1, 1]} : vector<2x96xf32> to vector<2x64xf32>
    %129 = arith.addf %127, %128 : vector<2x64xf32>
    %130 = arith.negf %129 : vector<2x64xf32>
    %131 = math.exp %130 : vector<2x64xf32>
    %cst_50 = arith.constant 1.000000e+00 : f32
    %132 = vector.broadcast %cst_50 : f32 to vector<2x64xf32>
    %133 = arith.addf %132, %131 : vector<2x64xf32>
    %134 = arith.divf %132, %133 : vector<2x64xf32>
    %135 = vector.extract_strided_slice %134 {offsets = [0, 0], sizes = [2, 32], strides = [1, 1]} : vector<2x64xf32> to vector<2x32xf32>
    %136 = vector.extract_strided_slice %134 {offsets = [0, 32], sizes = [2, 32], strides = [1, 1]} : vector<2x64xf32> to vector<2x32xf32>
    %137 = vector.extract_strided_slice %126 {offsets = [0, 64], sizes = [2, 32], strides = [1, 1]} : vector<2x96xf32> to vector<2x32xf32>
    %138 = arith.addf %137, %2 : vector<2x32xf32>
    %139 = vector.extract_strided_slice %123 {offsets = [0, 64], sizes = [2, 32], strides = [1, 1]} : vector<2x96xf32> to vector<2x32xf32>
    %140 = arith.mulf %135, %139 : vector<2x32xf32>
    %141 = arith.addf %138, %140 : vector<2x32xf32>
    %142 = math.tanh %141 : vector<2x32xf32>
    %cst_51 = arith.constant 1.000000e+00 : f32
    %143 = vector.broadcast %cst_51 : f32 to vector<2x32xf32>
    %144 = arith.subf %143, %136 : vector<2x32xf32>
    %145 = arith.mulf %144, %142 : vector<2x32xf32>
    %146 = arith.mulf %136, %112 : vector<2x32xf32>
    %147 = arith.addf %145, %146 : vector<2x32xf32>
    %c0_52 = arith.constant 0 : index
    %c96 = arith.constant 96 : index
    %148 = vector.load %arg8[%c0_52, %c96] : memref<2x256xf32, #tpu.memory_space<vmem>>, vector<2x32xf32>
    tpu.vector_store %arg8[%c0_52, %c96], %147 {strides = array<i32>} : memref<2x256xf32, #tpu.memory_space<vmem>>, vector<2x32xf32>,
    %c0_53 = arith.constant 0 : index
    %c0_54 = arith.constant 0 : index
    %149 = vector.load %arg5[%c0_53, %c0_54] : memref<32x100xf32, #tpu.memory_space<vmem>>, vector<32x100xf32>
    %cst_55 = arith.constant dense<0.000000e+00> : vector<2x100xf32>
    %150 = tpu.matmul %147, %149, %cst_55 {dimension_numbers = #tpu.dot_dimension_numbers<[1], [0], [0], [1], [0, 0, 1, 1], [], []>} : vector<2x32xf32>, vector<32x100xf32>, vector<2x100xf32> -> vector<2x100xf32>
    %151 = arith.addf %150, %5 : vector<2x100xf32>
    %152 = vector.extract_strided_slice %151 {offsets = [0, 96], sizes = [2, 4], strides = [1, 1]} : vector<2x100xf32> to vector<2x4xf32>
    %153 = arith.negf %152 : vector<2x4xf32>
    %154 = math.exp %153 : vector<2x4xf32>
    %cst_56 = arith.constant 1.000000e+00 : f32
    %155 = vector.broadcast %cst_56 : f32 to vector<2x4xf32>
    %156 = arith.addf %155, %154 : vector<2x4xf32>
    %157 = arith.divf %155, %156 : vector<2x4xf32>
    %158 = vector.extract_strided_slice %151 {offsets = [0, 0], sizes = [2, 96], strides = [1, 1]} : vector<2x100xf32> to vector<2x96xf32>
    %c0_57 = arith.constant 0 : index
    %c16 = arith.constant 16 : index
    %159 = vector.load %arg7[%c0_57, %c16] : memref<2x32xf32, #tpu.memory_space<vmem>>, vector<2x4xf32>
    tpu.vector_store %arg7[%c0_57, %c16], %157 {strides = array<i32>} : memref<2x32xf32, #tpu.memory_space<vmem>>, vector<2x4xf32>,
    %c0_58 = arith.constant 0 : index
    %c0_59 = arith.constant 0 : index
    %160 = vector.load %arg3[%c0_58, %c0_59] : memref<4x96xf32, #tpu.memory_space<vmem>>, vector<4x96xf32>
    %cst_60 = arith.constant dense<0.000000e+00> : vector<2x96xf32>
    %161 = tpu.matmul %157, %160, %cst_60 {dimension_numbers = #tpu.dot_dimension_numbers<[1], [0], [0], [1], [0, 0, 1, 1], [], []>} : vector<2x4xf32>, vector<4x96xf32>, vector<2x96xf32> -> vector<2x96xf32>
    %162 = vector.extract_strided_slice %161 {offsets = [0, 0], sizes = [2, 64], strides = [1, 1]} : vector<2x96xf32> to vector<2x64xf32>
    %163 = vector.extract_strided_slice %158 {offsets = [0, 0], sizes = [2, 64], strides = [1, 1]} : vector<2x96xf32> to vector<2x64xf32>
    %164 = arith.addf %162, %163 : vector<2x64xf32>
    %165 = arith.negf %164 : vector<2x64xf32>
    %166 = math.exp %165 : vector<2x64xf32>
    %cst_61 = arith.constant 1.000000e+00 : f32
    %167 = vector.broadcast %cst_61 : f32 to vector<2x64xf32>
    %168 = arith.addf %167, %166 : vector<2x64xf32>
    %169 = arith.divf %167, %168 : vector<2x64xf32>
    %170 = vector.extract_strided_slice %169 {offsets = [0, 0], sizes = [2, 32], strides = [1, 1]} : vector<2x64xf32> to vector<2x32xf32>
    %171 = vector.extract_strided_slice %169 {offsets = [0, 32], sizes = [2, 32], strides = [1, 1]} : vector<2x64xf32> to vector<2x32xf32>
    %172 = vector.extract_strided_slice %161 {offsets = [0, 64], sizes = [2, 32], strides = [1, 1]} : vector<2x96xf32> to vector<2x32xf32>
    %173 = arith.addf %172, %2 : vector<2x32xf32>
    %174 = vector.extract_strided_slice %158 {offsets = [0, 64], sizes = [2, 32], strides = [1, 1]} : vector<2x96xf32> to vector<2x32xf32>
    %175 = arith.mulf %170, %174 : vector<2x32xf32>
    %176 = arith.addf %173, %175 : vector<2x32xf32>
    %177 = math.tanh %176 : vector<2x32xf32>
    %cst_62 = arith.constant 1.000000e+00 : f32
    %178 = vector.broadcast %cst_62 : f32 to vector<2x32xf32>
    %179 = arith.subf %178, %171 : vector<2x32xf32>
    %180 = arith.mulf %179, %177 : vector<2x32xf32>
    %181 = arith.mulf %171, %147 : vector<2x32xf32>
    %182 = arith.addf %180, %181 : vector<2x32xf32>
    %c0_63 = arith.constant 0 : index
    %c128 = arith.constant 128 : index
    %183 = vector.load %arg8[%c0_63, %c128] : memref<2x256xf32, #tpu.memory_space<vmem>>, vector<2x32xf32>
    tpu.vector_store %arg8[%c0_63, %c128], %182 {strides = array<i32>} : memref<2x256xf32, #tpu.memory_space<vmem>>, vector<2x32xf32>,
    %c0_64 = arith.constant 0 : index
    %c0_65 = arith.constant 0 : index
    %184 = vector.load %arg5[%c0_64, %c0_65] : memref<32x100xf32, #tpu.memory_space<vmem>>, vector<32x100xf32>
    %cst_66 = arith.constant dense<0.000000e+00> : vector<2x100xf32>
    %185 = tpu.matmul %182, %184, %cst_66 {dimension_numbers = #tpu.dot_dimension_numbers<[1], [0], [0], [1], [0, 0, 1, 1], [], []>} : vector<2x32xf32>, vector<32x100xf32>, vector<2x100xf32> -> vector<2x100xf32>
    %186 = arith.addf %185, %5 : vector<2x100xf32>
    %187 = vector.extract_strided_slice %186 {offsets = [0, 96], sizes = [2, 4], strides = [1, 1]} : vector<2x100xf32> to vector<2x4xf32>
    %188 = arith.negf %187 : vector<2x4xf32>
    %189 = math.exp %188 : vector<2x4xf32>
    %cst_67 = arith.constant 1.000000e+00 : f32
    %190 = vector.broadcast %cst_67 : f32 to vector<2x4xf32>
    %191 = arith.addf %190, %189 : vector<2x4xf32>
    %192 = arith.divf %190, %191 : vector<2x4xf32>
    %193 = vector.extract_strided_slice %186 {offsets = [0, 0], sizes = [2, 96], strides = [1, 1]} : vector<2x100xf32> to vector<2x96xf32>
    %c0_68 = arith.constant 0 : index
    %c20 = arith.constant 20 : index
    %194 = vector.load %arg7[%c0_68, %c20] : memref<2x32xf32, #tpu.memory_space<vmem>>, vector<2x4xf32>
    tpu.vector_store %arg7[%c0_68, %c20], %192 {strides = array<i32>} : memref<2x32xf32, #tpu.memory_space<vmem>>, vector<2x4xf32>,
    %c0_69 = arith.constant 0 : index
    %c0_70 = arith.constant 0 : index
    %195 = vector.load %arg3[%c0_69, %c0_70] : memref<4x96xf32, #tpu.memory_space<vmem>>, vector<4x96xf32>
    %cst_71 = arith.constant dense<0.000000e+00> : vector<2x96xf32>
    %196 = tpu.matmul %192, %195, %cst_71 {dimension_numbers = #tpu.dot_dimension_numbers<[1], [0], [0], [1], [0, 0, 1, 1], [], []>} : vector<2x4xf32>, vector<4x96xf32>, vector<2x96xf32> -> vector<2x96xf32>
    %197 = vector.extract_strided_slice %196 {offsets = [0, 0], sizes = [2, 64], strides = [1, 1]} : vector<2x96xf32> to vector<2x64xf32>
    %198 = vector.extract_strided_slice %193 {offsets = [0, 0], sizes = [2, 64], strides = [1, 1]} : vector<2x96xf32> to vector<2x64xf32>
    %199 = arith.addf %197, %198 : vector<2x64xf32>
    %200 = arith.negf %199 : vector<2x64xf32>
    %201 = math.exp %200 : vector<2x64xf32>
    %cst_72 = arith.constant 1.000000e+00 : f32
    %202 = vector.broadcast %cst_72 : f32 to vector<2x64xf32>
    %203 = arith.addf %202, %201 : vector<2x64xf32>
    %204 = arith.divf %202, %203 : vector<2x64xf32>
    %205 = vector.extract_strided_slice %204 {offsets = [0, 0], sizes = [2, 32], strides = [1, 1]} : vector<2x64xf32> to vector<2x32xf32>
    %206 = vector.extract_strided_slice %204 {offsets = [0, 32], sizes = [2, 32], strides = [1, 1]} : vector<2x64xf32> to vector<2x32xf32>
    %207 = vector.extract_strided_slice %196 {offsets = [0, 64], sizes = [2, 32], strides = [1, 1]} : vector<2x96xf32> to vector<2x32xf32>
    %208 = arith.addf %207, %2 : vector<2x32xf32>
    %209 = vector.extract_strided_slice %193 {offsets = [0, 64], sizes = [2, 32], strides = [1, 1]} : vector<2x96xf32> to vector<2x32xf32>
    %210 = arith.mulf %205, %209 : vector<2x32xf32>
    %211 = arith.addf %208, %210 : vector<2x32xf32>
    %212 = math.tanh %211 : vector<2x32xf32>
    %cst_73 = arith.constant 1.000000e+00 : f32
    %213 = vector.broadcast %cst_73 : f32 to vector<2x32xf32>
    %214 = arith.subf %213, %206 : vector<2x32xf32>
    %215 = arith.mulf %214, %212 : vector<2x32xf32>
    %216 = arith.mulf %206, %182 : vector<2x32xf32>
    %217 = arith.addf %215, %216 : vector<2x32xf32>
    %c0_74 = arith.constant 0 : index
    %c160 = arith.constant 160 : index
    %218 = vector.load %arg8[%c0_74, %c160] : memref<2x256xf32, #tpu.memory_space<vmem>>, vector<2x32xf32>
    tpu.vector_store %arg8[%c0_74, %c160], %217 {strides = array<i32>} : memref<2x256xf32, #tpu.memory_space<vmem>>, vector<2x32xf32>,
    %c0_75 = arith.constant 0 : index
    %c0_76 = arith.constant 0 : index
    %219 = vector.load %arg5[%c0_75, %c0_76] : memref<32x100xf32, #tpu.memory_space<vmem>>, vector<32x100xf32>
    %cst_77 = arith.constant dense<0.000000e+00> : vector<2x100xf32>
    %220 = tpu.matmul %217, %219, %cst_77 {dimension_numbers = #tpu.dot_dimension_numbers<[1], [0], [0], [1], [0, 0, 1, 1], [], []>} : vector<2x32xf32>, vector<32x100xf32>, vector<2x100xf32> -> vector<2x100xf32>
    %221 = arith.addf %220, %5 : vector<2x100xf32>
    %222 = vector.extract_strided_slice %221 {offsets = [0, 96], sizes = [2, 4], strides = [1, 1]} : vector<2x100xf32> to vector<2x4xf32>
    %223 = arith.negf %222 : vector<2x4xf32>
    %224 = math.exp %223 : vector<2x4xf32>
    %cst_78 = arith.constant 1.000000e+00 : f32
    %225 = vector.broadcast %cst_78 : f32 to vector<2x4xf32>
    %226 = arith.addf %225, %224 : vector<2x4xf32>
    %227 = arith.divf %225, %226 : vector<2x4xf32>
    %228 = vector.extract_strided_slice %221 {offsets = [0, 0], sizes = [2, 96], strides = [1, 1]} : vector<2x100xf32> to vector<2x96xf32>
    %c0_79 = arith.constant 0 : index
    %c24 = arith.constant 24 : index
    %229 = vector.load %arg7[%c0_79, %c24] : memref<2x32xf32, #tpu.memory_space<vmem>>, vector<2x4xf32>
    tpu.vector_store %arg7[%c0_79, %c24], %227 {strides = array<i32>} : memref<2x32xf32, #tpu.memory_space<vmem>>, vector<2x4xf32>,
    %c0_80 = arith.constant 0 : index
    %c0_81 = arith.constant 0 : index
    %230 = vector.load %arg3[%c0_80, %c0_81] : memref<4x96xf32, #tpu.memory_space<vmem>>, vector<4x96xf32>
    %cst_82 = arith.constant dense<0.000000e+00> : vector<2x96xf32>
    %231 = tpu.matmul %227, %230, %cst_82 {dimension_numbers = #tpu.dot_dimension_numbers<[1], [0], [0], [1], [0, 0, 1, 1], [], []>} : vector<2x4xf32>, vector<4x96xf32>, vector<2x96xf32> -> vector<2x96xf32>
    %232 = vector.extract_strided_slice %231 {offsets = [0, 0], sizes = [2, 64], strides = [1, 1]} : vector<2x96xf32> to vector<2x64xf32>
    %233 = vector.extract_strided_slice %228 {offsets = [0, 0], sizes = [2, 64], strides = [1, 1]} : vector<2x96xf32> to vector<2x64xf32>
    %234 = arith.addf %232, %233 : vector<2x64xf32>
    %235 = arith.negf %234 : vector<2x64xf32>
    %236 = math.exp %235 : vector<2x64xf32>
    %cst_83 = arith.constant 1.000000e+00 : f32
    %237 = vector.broadcast %cst_83 : f32 to vector<2x64xf32>
    %238 = arith.addf %237, %236 : vector<2x64xf32>
    %239 = arith.divf %237, %238 : vector<2x64xf32>
    %240 = vector.extract_strided_slice %239 {offsets = [0, 0], sizes = [2, 32], strides = [1, 1]} : vector<2x64xf32> to vector<2x32xf32>
    %241 = vector.extract_strided_slice %239 {offsets = [0, 32], sizes = [2, 32], strides = [1, 1]} : vector<2x64xf32> to vector<2x32xf32>
    %242 = vector.extract_strided_slice %231 {offsets = [0, 64], sizes = [2, 32], strides = [1, 1]} : vector<2x96xf32> to vector<2x32xf32>
    %243 = arith.addf %242, %2 : vector<2x32xf32>
    %244 = vector.extract_strided_slice %228 {offsets = [0, 64], sizes = [2, 32], strides = [1, 1]} : vector<2x96xf32> to vector<2x32xf32>
    %245 = arith.mulf %240, %244 : vector<2x32xf32>
    %246 = arith.addf %243, %245 : vector<2x32xf32>
    %247 = math.tanh %246 : vector<2x32xf32>
    %cst_84 = arith.constant 1.000000e+00 : f32
    %248 = vector.broadcast %cst_84 : f32 to vector<2x32xf32>
    %249 = arith.subf %248, %241 : vector<2x32xf32>
    %250 = arith.mulf %249, %247 : vector<2x32xf32>
    %251 = arith.mulf %241, %217 : vector<2x32xf32>
    %252 = arith.addf %250, %251 : vector<2x32xf32>
    %c0_85 = arith.constant 0 : index
    %c192 = arith.constant 192 : index
    %253 = vector.load %arg8[%c0_85, %c192] : memref<2x256xf32, #tpu.memory_space<vmem>>, vector<2x32xf32>
    tpu.vector_store %arg8[%c0_85, %c192], %252 {strides = array<i32>} : memref<2x256xf32, #tpu.memory_space<vmem>>, vector<2x32xf32>,
    %c0_86 = arith.constant 0 : index
    %c0_87 = arith.constant 0 : index
    %254 = vector.load %arg5[%c0_86, %c0_87] : memref<32x100xf32, #tpu.memory_space<vmem>>, vector<32x100xf32>
    %cst_88 = arith.constant dense<0.000000e+00> : vector<2x100xf32>
    %255 = tpu.matmul %252, %254, %cst_88 {dimension_numbers = #tpu.dot_dimension_numbers<[1], [0], [0], [1], [0, 0, 1, 1], [], []>} : vector<2x32xf32>, vector<32x100xf32>, vector<2x100xf32> -> vector<2x100xf32>
    %256 = arith.addf %255, %5 : vector<2x100xf32>
    %257 = vector.extract_strided_slice %256 {offsets = [0, 96], sizes = [2, 4], strides = [1, 1]} : vector<2x100xf32> to vector<2x4xf32>
    %258 = arith.negf %257 : vector<2x4xf32>
    %259 = math.exp %258 : vector<2x4xf32>
    %cst_89 = arith.constant 1.000000e+00 : f32
    %260 = vector.broadcast %cst_89 : f32 to vector<2x4xf32>
    %261 = arith.addf %260, %259 : vector<2x4xf32>
    %262 = arith.divf %260, %261 : vector<2x4xf32>
    %263 = vector.extract_strided_slice %256 {offsets = [0, 0], sizes = [2, 96], strides = [1, 1]} : vector<2x100xf32> to vector<2x96xf32>
    %c0_90 = arith.constant 0 : index
    %c28 = arith.constant 28 : index
    %264 = vector.load %arg7[%c0_90, %c28] : memref<2x32xf32, #tpu.memory_space<vmem>>, vector<2x4xf32>
    tpu.vector_store %arg7[%c0_90, %c28], %262 {strides = array<i32>} : memref<2x32xf32, #tpu.memory_space<vmem>>, vector<2x4xf32>,
    %c0_91 = arith.constant 0 : index
    %c0_92 = arith.constant 0 : index
    %265 = vector.load %arg3[%c0_91, %c0_92] : memref<4x96xf32, #tpu.memory_space<vmem>>, vector<4x96xf32>
    %cst_93 = arith.constant dense<0.000000e+00> : vector<2x96xf32>
    %266 = tpu.matmul %262, %265, %cst_93 {dimension_numbers = #tpu.dot_dimension_numbers<[1], [0], [0], [1], [0, 0, 1, 1], [], []>} : vector<2x4xf32>, vector<4x96xf32>, vector<2x96xf32> -> vector<2x96xf32>
    %267 = vector.extract_strided_slice %266 {offsets = [0, 0], sizes = [2, 64], strides = [1, 1]} : vector<2x96xf32> to vector<2x64xf32>
    %268 = vector.extract_strided_slice %263 {offsets = [0, 0], sizes = [2, 64], strides = [1, 1]} : vector<2x96xf32> to vector<2x64xf32>
    %269 = arith.addf %267, %268 : vector<2x64xf32>
    %270 = arith.negf %269 : vector<2x64xf32>
    %271 = math.exp %270 : vector<2x64xf32>
    %cst_94 = arith.constant 1.000000e+00 : f32
    %272 = vector.broadcast %cst_94 : f32 to vector<2x64xf32>
    %273 = arith.addf %272, %271 : vector<2x64xf32>
    %274 = arith.divf %272, %273 : vector<2x64xf32>
    %275 = vector.extract_strided_slice %274 {offsets = [0, 0], sizes = [2, 32], strides = [1, 1]} : vector<2x64xf32> to vector<2x32xf32>
    %276 = vector.extract_strided_slice %274 {offsets = [0, 32], sizes = [2, 32], strides = [1, 1]} : vector<2x64xf32> to vector<2x32xf32>
    %277 = vector.extract_strided_slice %266 {offsets = [0, 64], sizes = [2, 32], strides = [1, 1]} : vector<2x96xf32> to vector<2x32xf32>
    %278 = arith.addf %277, %2 : vector<2x32xf32>
    %279 = vector.extract_strided_slice %263 {offsets = [0, 64], sizes = [2, 32], strides = [1, 1]} : vector<2x96xf32> to vector<2x32xf32>
    %280 = arith.mulf %275, %279 : vector<2x32xf32>
    %281 = arith.addf %278, %280 : vector<2x32xf32>
    %282 = math.tanh %281 : vector<2x32xf32>
    %cst_95 = arith.constant 1.000000e+00 : f32
    %283 = vector.broadcast %cst_95 : f32 to vector<2x32xf32>
    %284 = arith.subf %283, %276 : vector<2x32xf32>
    %285 = arith.mulf %284, %282 : vector<2x32xf32>
    %286 = arith.mulf %276, %252 : vector<2x32xf32>
    %287 = arith.addf %285, %286 : vector<2x32xf32>
    %c0_96 = arith.constant 0 : index
    %c224 = arith.constant 224 : index
    %288 = vector.load %arg8[%c0_96, %c224] : memref<2x256xf32, #tpu.memory_space<vmem>>, vector<2x32xf32>
    tpu.vector_store %arg8[%c0_96, %c224], %287 {strides = array<i32>} : memref<2x256xf32, #tpu.memory_space<vmem>>, vector<2x32xf32>,
    return
  }
}

</mosaic_0001>

<llo_original>
// kernel: gru_forward.1
$region0: #{gru_forward.1}
  #allocation0 [shape = 'u32[]', space=smem, size = 0x4, offset = 0x4, fixed_abs, tag = 'smem constant byte address 0x4 - core index']
  #allocation1 [shape = 'u32[144,128]{1,0:T(1,128)}', space=vmem, size = 0x12000, scoped, tag = 'internal scratch']
  %s0 = inlined_call_operand.vmem [shape: f32[2,32], index: 0, kind: input, shape index: {}]
  %s1 = inlined_call_operand.vmem [shape: f32[32,4], index: 1, kind: input, shape index: {}]
  %s2 = inlined_call_operand.vmem [shape: f32[1,4], index: 2, kind: input, shape index: {}]
  %s3 = inlined_call_operand.vmem [shape: f32[4,96], index: 3, kind: input, shape index: {}]
  %s4 = inlined_call_operand.vmem [shape: f32[1,32], index: 4, kind: input, shape index: {}]
  %s5 = inlined_call_operand.vmem [shape: f32[32,100], index: 5, kind: input, shape index: {}]
  %s6 = inlined_call_operand.vmem [shape: f32[1,100], index: 6, kind: input, shape index: {}]
  %s7 = inlined_call_operand.vmem [shape: f32[2,32], index: 7, kind: output, shape index: {0}]
  %s8 = inlined_call_operand.vmem [shape: f32[2,256], index: 8, kind: output, shape index: {1}]
  %9 = xla_tuple %s7, %s8
  %s10 = sld [smem:[#allocation0]]
  $region46: #{gru_forward.1} parent=0
    _
  %s12 = ssub.s32 1, %s10
  %s13 = scalar_select 0, %s12, %s10
  // Predicated region
  $region2: #{gru_forward.1} parent=0 // pred_check
    _
  $region3: #{gru_forward.1} parent=0 // pred_check_branch
    %15 = sbr.rel (0) target = $region5
  $region4: #{gru_forward.1} parent=0 // pred_region
    _
  $region5: #{gru_forward.1} parent=0 // pred_fallthru
    _
  // Predicated region
  $region6: #{gru_forward.1} parent=0 // pred_check
    _
  $region7: #{gru_forward.1} parent=0 // pred_check_branch
    %17 = sbr.rel (0) target = $region9
  $region8: #{gru_forward.1} parent=0 // pred_region
    _
  $region9: #{gru_forward.1} parent=0 // pred_fallthru
    _
  // Predicated region
  $region10: #{gru_forward.1} parent=0 // pred_check
    _
  $region11: #{gru_forward.1} parent=0 // pred_check_branch
    %19 = sbr.rel (0) target = $region13
  $region12: #{gru_forward.1} parent=0 // pred_region
    _
  $region13: #{gru_forward.1} parent=0 // pred_fallthru
    _
  // Predicated region
  $region14: #{gru_forward.1} parent=0 // pred_check
    _
  $region15: #{gru_forward.1} parent=0 // pred_check_branch
    %21 = sbr.rel (0) target = $region17
  $region16: #{gru_forward.1} parent=0 // pred_region
    _
  $region17: #{gru_forward.1} parent=0 // pred_fallthru
    _
  // Predicated region
  $region18: #{gru_forward.1} parent=0 // pred_check
    _
  $region19: #{gru_forward.1} parent=0 // pred_check_branch
    %23 = sbr.rel (0) target = $region21
  $region20: #{gru_forward.1} parent=0 // pred_region
    _
  $region21: #{gru_forward.1} parent=0 // pred_fallthru
    _
  // Predicated region
  $region22: #{gru_forward.1} parent=0 // pred_check
    _
  $region23: #{gru_forward.1} parent=0 // pred_check_branch
    %25 = sbr.rel (0) target = $region25
  $region24: #{gru_forward.1} parent=0 // pred_region
    _
  $region25: #{gru_forward.1} parent=0 // pred_fallthru
    _
  // Predicated region
  $region26: #{gru_forward.1} parent=0 // pred_check
    _
  $region27: #{gru_forward.1} parent=0 // pred_check_branch
    %27 = sbr.rel (0) target = $region29
  $region28: #{gru_forward.1} parent=0 // pred_region
    _
  $region29: #{gru_forward.1} parent=0 // pred_fallthru
    _
  %v28 = vld [vmem:[%s4] sm:$0x1]
  %v30 = vlaneseq
  %v31 = vshrl.u32 %v30, 7
  %v32 = vsub.s32 0, %v31
  %v33 = vrot.slane %v28, %v32
  %v34 = vld [vmem:[%s6] sm:$0x1]
  %v36 = vlaneseq
  %v37 = vshrl.u32 %v36, 7
  %v38 = vsub.s32 0, %v37
  %v39 = vrot.slane %v34, %v38
  %v41 = vld [vmem:[%s0] sm:$0x3]
  %v42 = vld [vmem:[%s1] sm:$0xff]
  %v43 = vld [vmem:[%s1 + $0x8] sm:$0xff]
  %v44 = vld [vmem:[%s1 + $0x10] sm:$0xff]
  %v45 = vld [vmem:[%s1 + $0x18] sm:$0xff]
  %v46 = vld [vmem:[%s2] sm:$0x1]
  %v48 = vlaneseq
  %v49 = vshrl.u32 %v48, 7
  %v50 = vsub.s32 0, %v49
  %v51 = vrot.slane %v46, %v50
  %vm53 = vcmask 261120
  %v55 = vsel %vm53, %v41, 0
  %57 = vmatprep.subr.mxu0 0.0
  %58 = vmatpush1.msra.mxu0 %v42
  %59 = vmatprep.subr.mxu0 0.0
  %60 = vmatpush1.msra.mxu0 %v43
  %61 = vmatprep.subr.mxu0 0.0
  %62 = vmatpush1.msra.mxu0 %v44
  %63 = vmatprep.subr.mxu0 0.0
  %64 = vmatpush1.msra.mxu0 %v45
  %65 = vmatprep.subr.mxu0 0.0
  %66 = vmatpush1.msra.mxu0 0.0
  %67 = vmatprep.subr.mxu0 0.0
  %68 = vmatpush1.msra.mxu0 0.0
  %69 = vmatprep.subr.mxu0 0.0
  %70 = vmatpush1.msra.mxu0 0.0
  %71 = vmatprep.subr.mxu0 0.0
  %72 = vmatpush1.msra.mxu0 0.0
  %73 = vmatprep.subr.mxu0 0.0
  %74 = vmatpush1.msra.mxu0 0.0
  %75 = vmatprep.subr.mxu0 0.0
  %76 = vmatpush1.msra.mxu0 0.0
  %77 = vmatprep.subr.mxu0 0.0
  %78 = vmatpush1.msra.mxu0 0.0
  %79 = vmatprep.subr.mxu0 0.0
  %80 = vmatpush1.msra.mxu0 0.0
  %81 = vmatprep.subr.mxu0 0.0
  %82 = vmatpush1.msra.mxu0 0.0
  %83 = vmatprep.subr.mxu0 0.0
  %84 = vmatpush1.msra.mxu0 0.0
  %85 = vmatprep.subr.mxu0 0.0
  %86 = vmatpush1.msra.mxu0 0.0
  %87 = vmatprep.subr.mxu0 0.0
  %88 = vmatpush1.msra.mxu0 0.0
  %89 = vmatprep.subr.mxu0 0.0
  %90 = vmatpush1.msra.mxu0 0.0
  %91 = vmatprep.subr.mxu0 0.0
  %92 = vmatpush1.msra.mxu0 0.0
  %93 = vmatprep.subr.mxu0 0.0
  %94 = vmatpush1.msra.mxu0 0.0
  %95 = vmatprep.subr.mxu0 0.0
  %96 = vmatpush1.msra.mxu0 0.0
  %97 = vmatprep.subr.mxu0 0.0
  %98 = vmatpush1.msra.mxu0 0.0
  %99 = vmatprep.subr.mxu0 0.0
  %100 = vmatpush1.msra.mxu0 0.0
  %101 = vmatprep.subr.mxu0 0.0
  %102 = vmatpush1.msra.mxu0 0.0
  %103 = vmatprep.subr.mxu0 0.0
  %104 = vmatpush1.msra.mxu0 0.0
  %105 = vmatprep.subr.mxu0 0.0
  %106 = vmatpush1.msra.mxu0 0.0
  %107 = vmatprep.subr.mxu0 0.0
  %108 = vmatpush1.msra.mxu0 0.0
  %109 = vmatprep.subr.mxu0 0.0
  %110 = vmatpush1.msra.mxu0 0.0
  %111 = vmatprep.subr.mxu0 0.0
  %112 = vmatpush1.msra.mxu0 0.0
  %113 = vmatprep.subr.mxu0 0.0
  %114 = vmatpush1.msra.mxu0 0.0
  %115 = vmatprep.subr.mxu0 0.0
  %116 = vmatpush1.msra.mxu0 0.0
  %117 = vmatprep.subr.mxu0 0.0
  %118 = vmatpush1.msra.mxu0 0.0
  %119 = vmatprep.subr.mxu0 0.0
  %120 = vmatpush1.msra.mxu0 0.0
  %121 = vmatprep.mubr.f32.mxu0 0.0
  %122 = vmatmul.mubr.f32.gmra.mrb[0].mxu0 %v55
  %v123 = vpop.f32.mrb[0].mxu0
  %v124 = vadd.f32 %v51, %v123
  %v125 = vpop.f32.mrb[0].mxu0
  %126 = vdwg.mxu0
  %v127 = vxor.u32 %v124, 2147483648
  %v128 = vmul.f32 %v127, 1.442695
  %v129 = vpow.pop %v128
  %v130 = vadd.f32 %v129, 1.0
  %v131 = vrcp.pop %v130
  %v132 = vmul.f32 1.0, %v131
  %vm133 = vcmask 25600
  %134 = vst.msk [vmem:[%s7] sm:$0x3] %vm133, %v132
  %v135 = vld [vmem:[%s3] sm:$0xf]
  %vm136 = vcmask 31744
  %v138 = vsel %vm136, %v132, 0
  %vm140 = vcmask 1043456
  %v142 = vsel %vm140, %v135, 0
  %144 = vmatprep.subr.mxu0 0.0
  %145 = vmatpush1.msra.mxu0 %v142
  %146 = vmatprep.subr.mxu0 0.0
  %147 = vmatpush1.msra.mxu0 0.0
  %148 = vmatprep.subr.mxu0 0.0
  %149 = vmatpush1.msra.mxu0 0.0
  %150 = vmatprep.subr.mxu0 0.0
  %151 = vmatpush1.msra.mxu0 0.0
  %152 = vmatprep.subr.mxu0 0.0
  %153 = vmatpush1.msra.mxu0 0.0
  %154 = vmatprep.subr.mxu0 0.0
  %155 = vmatpush1.msra.mxu0 0.0
  %156 = vmatprep.subr.mxu0 0.0
  %157 = vmatpush1.msra.mxu0 0.0
  %158 = vmatprep.subr.mxu0 0.0
  %159 = vmatpush1.msra.mxu0 0.0
  %160 = vmatprep.subr.mxu0 0.0
  %161 = vmatpush1.msra.mxu0 0.0
  %162 = vmatprep.subr.mxu0 0.0
  %163 = vmatpush1.msra.mxu0 0.0
  %164 = vmatprep.subr.mxu0 0.0
  %165 = vmatpush1.msra.mxu0 0.0
  %166 = vmatprep.subr.mxu0 0.0
  %167 = vmatpush1.msra.mxu0 0.0
  %168 = vmatprep.subr.mxu0 0.0
  %169 = vmatpush1.msra.mxu0 0.0
  %170 = vmatprep.subr.mxu0 0.0
  %171 = vmatpush1.msra.mxu0 0.0
  %172 = vmatprep.subr.mxu0 0.0
  %173 = vmatpush1.msra.mxu0 0.0
  %174 = vmatprep.subr.mxu0 0.0
  %175 = vmatpush1.msra.mxu0 0.0
  %176 = vmatprep.subr.mxu0 0.0
  %177 = vmatpush1.msra.mxu0 0.0
  %178 = vmatprep.subr.mxu0 0.0
  %179 = vmatpush1.msra.mxu0 0.0
  %180 = vmatprep.subr.mxu0 0.0
  %181 = vmatpush1.msra.mxu0 0.0
  %182 = vmatprep.subr.mxu0 0.0
  %183 = vmatpush1.msra.mxu0 0.0
  %184 = vmatprep.subr.mxu0 0.0
  %185 = vmatpush1.msra.mxu0 0.0
  %186 = vmatprep.subr.mxu0 0.0
  %187 = vmatpush1.msra.mxu0 0.0
  %188 = vmatprep.subr.mxu0 0.0
  %189 = vmatpush1.msra.mxu0 0.0
  %190 = vmatprep.subr.mxu0 0.0
  %191 = vmatpush1.msra.mxu0 0.0
  %192 = vmatprep.subr.mxu0 0.0
  %193 = vmatpush1.msra.mxu0 0.0
  %194 = vmatprep.subr.mxu0 0.0
  %195 = vmatpush1.msra.mxu0 0.0
  %196 = vmatprep.subr.mxu0 0.0
  %197 = vmatpush1.msra.mxu0 0.0
  %198 = vmatprep.subr.mxu0 0.0
  %199 = vmatpush1.msra.mxu0 0.0
  %200 = vmatprep.subr.mxu0 0.0
  %201 = vmatpush1.msra.mxu0 0.0
  %202 = vmatprep.subr.mxu0 0.0
  %203 = vmatpush1.msra.mxu0 0.0
  %204 = vmatprep.subr.mxu0 0.0
  %205 = vmatpush1.msra.mxu0 0.0
  %206 = vmatprep.subr.mxu0 0.0
  %207 = vmatpush1.msra.mxu0 0.0
  %208 = vmatprep.mubr.f32.mxu0 0.0
  %209 = vmatmul.mubr.f32.gmra.mrb[0].mxu0 %v138
  %v210 = vpop.f32.mrb[0].mxu0
  %v211 = vadd.f32 0.0, %v210
  %v212 = vpop.f32.mrb[0].mxu0
  %213 = vdwg.mxu0
  %v214 = vadd.f32 %v211, %v39
  %v215 = vxor.u32 %v214, 2147483648
  %v216 = vmul.f32 %v215, 1.442695
  %v217 = vpow.pop %v216
  %v218 = vadd.f32 %v217, 1.0
  %v219 = vrcp.pop %v218
  %v220 = vmul.f32 1.0, %v219
  %221 = vrot.lane.b32.xlu0 %v33, 64
  %v222 = vpop.permute.xlu0 %221
  %v224 = vadd.f32 %v211, %v222
  %225 = vrot.lane.b32.xlu0 %v39, 64
  %v226 = vpop.permute.xlu0 %225
  %v228 = vmul.f32 %v220, %v226
  %230 = vrot.lane.b32.xlu0 %v228, 64
  %v231 = vpop.permute.xlu0 %230
  %v233 = vadd.f32 %v224, %v231
  %v234 = vtanh.pop %v233
  %v235 = vsub.f32 1.0, %v220
  %237 = vrot.lane.b32.xlu0 %v234, 96
  %v238 = vpop.permute.xlu0 %237
  %v240 = vmul.f32 %v235, %v238
  %v241 = vmul.f32 %v220, 0.0
  %v242 = vadd.f32 %v240, %v241
  %v245 = vunpack.c.l.s4 1983009808
  %v246 = vunpack.c.0.s8 %v245
  %v247 = vlaneseq
  %v248 = vshrl.u32 %v247, 7
  %v249 = vsub.s32 %v246, %v248
  %v250 = vrot.slane %v242, %v249
  %251 = vrot.lane.b32.xlu0 %v250, 96
  %v252 = vpop.permute.xlu0 %251
  %vm254 = vcmask 254976
  %255 = vst.msk [vmem:[%s8] sm:$0x3] %vm254, %v252
  %v256 = vld [vmem:[%s5] sm:$0xff]
  %v257 = vld [vmem:[%s5 + $0x8] sm:$0xff]
  %v258 = vld [vmem:[%s5 + $0x10] sm:$0xff]
  %v259 = vld [vmem:[%s5 + $0x18] sm:$0xff]
  %260 = vrot.lane.b32.xlu0 %v242, 96
  %v261 = vpop.permute.xlu0 %260
  %v262 = vsel %vm53, %v261, 0
  %264 = vmatprep.subr.mxu0 0.0
  %265 = vmatpush1.msra.mxu0 %v256
  %266 = vmatprep.subr.mxu0 0.0
  %267 = vmatpush1.msra.mxu0 %v257
  %268 = vmatprep.subr.mxu0 0.0
  %269 = vmatpush1.msra.mxu0 %v258
  %270 = vmatprep.subr.mxu0 0.0
  %271 = vmatpush1.msra.mxu0 %v259
  %272 = vmatprep.subr.mxu0 0.0
  %273 = vmatpush1.msra.mxu0 0.0
  %274 = vmatprep.subr.mxu0 0.0
  %275 = vmatpush1.msra.mxu0 0.0
  %276 = vmatprep.subr.mxu0 0.0
  %277 = vmatpush1.msra.mxu0 0.0
  %278 = vmatprep.subr.mxu0 0.0
  %279 = vmatpush1.msra.mxu0 0.0
  %280 = vmatprep.subr.mxu0 0.0
  %281 = vmatpush1.msra.mxu0 0.0
  %282 = vmatprep.subr.mxu0 0.0
  %283 = vmatpush1.msra.mxu0 0.0
  %284 = vmatprep.subr.mxu0 0.0
  %285 = vmatpush1.msra.mxu0 0.0
  %286 = vmatprep.subr.mxu0 0.0
  %287 = vmatpush1.msra.mxu0 0.0
  %288 = vmatprep.subr.mxu0 0.0
  %289 = vmatpush1.msra.mxu0 0.0
  %290 = vmatprep.subr.mxu0 0.0
  %291 = vmatpush1.msra.mxu0 0.0
  %292 = vmatprep.subr.mxu0 0.0
  %293 = vmatpush1.msra.mxu0 0.0
  %294 = vmatprep.subr.mxu0 0.0
  %295 = vmatpush1.msra.mxu0 0.0
  %296 = vmatprep.subr.mxu0 0.0
  %297 = vmatpush1.msra.mxu0 0.0
  %298 = vmatprep.subr.mxu0 0.0
  %299 = vmatpush1.msra.mxu0 0.0
  %300 = vmatprep.subr.mxu0 0.0
  %301 = vmatpush1.msra.mxu0 0.0
  %302 = vmatprep.subr.mxu0 0.0
  %303 = vmatpush1.msra.mxu0 0.0
  %304 = vmatprep.subr.mxu0 0.0
  %305 = vmatpush1.msra.mxu0 0.0
  %306 = vmatprep.subr.mxu0 0.0
  %307 = vmatpush1.msra.mxu0 0.0
  %308 = vmatprep.subr.mxu0 0.0
  %309 = vmatpush1.msra.mxu0 0.0
  %310 = vmatprep.subr.mxu0 0.0
  %311 = vmatpush1.msra.mxu0 0.0
  %312 = vmatprep.subr.mxu0 0.0
  %313 = vmatpush1.msra.mxu0 0.0
  %314 = vmatprep.subr.mxu0 0.0
  %315 = vmatpush1.msra.mxu0 0.0
  %316 = vmatprep.subr.mxu0 0.0
  %317 = vmatpush1.msra.mxu0 0.0
  %318 = vmatprep.subr.mxu0 0.0
  %319 = vmatpush1.msra.mxu0 0.0
  %320 = vmatprep.subr.mxu0 0.0
  %321 = vmatpush1.msra.mxu0 0.0
  %322 = vmatprep.subr.mxu0 0.0
  %323 = vmatpush1.msra.mxu0 0.0
  %324 = vmatprep.subr.mxu0 0.0
  %325 = vmatpush1.msra.mxu0 0.0
  %326 = vmatprep.subr.mxu0 0.0
  %327 = vmatpush1.msra.mxu0 0.0
  %328 = vmatprep.mubr.f32.mxu0 0.0
  %329 = vmatmul.mubr.f32.gmra.mrb[0].mxu0 %v262
  %v330 = vpop.f32.mrb[0].mxu0
  %v331 = vadd.f32 %v39, %v330
  %v332 = vpop.f32.mrb[0].mxu0
  %333 = vdwg.mxu0
  %v334 = vxor.u32 %v331, 2147483648
  %v335 = vmul.f32 %v334, 1.442695
  %v336 = vpow.pop %v335
  %v337 = vadd.f32 %v336, 1.0
  %v338 = vrcp.pop %v337
  %v339 = vmul.f32 1.0, %v338
  %341 = vrot.lane.b32.xlu0 %v339, 36
  %v342 = vpop.permute.xlu0 %341
  %vm344 = vcmask 58400
  %345 = vst.msk [vmem:[%s7] sm:$0x3] %vm344, %v342
  %v346 = vld [vmem:[%s3] sm:$0xf]
  %347 = vrot.lane.b32.xlu0 %v339, 32
  %v348 = vpop.permute.xlu0 %347
  %v349 = vsel %vm136, %v348, 0
  %v352 = vsel %vm140, %v346, 0
  %354 = vmatprep.subr.mxu0 0.0
  %355 = vmatpush1.msra.mxu0 %v352
  %356 = vmatprep.subr.mxu0 0.0
  %357 = vmatpush1.msra.mxu0 0.0
  %358 = vmatprep.subr.mxu0 0.0
  %359 = vmatpush1.msra.mxu0 0.0
  %360 = vmatprep.subr.mxu0 0.0
  %361 = vmatpush1.msra.mxu0 0.0
  %362 = vmatprep.subr.mxu0 0.0
  %363 = vmatpush1.msra.mxu0 0.0
  %364 = vmatprep.subr.mxu0 0.0
  %365 = vmatpush1.msra.mxu0 0.0
  %366 = vmatprep.subr.mxu0 0.0
  %367 = vmatpush1.msra.mxu0 0.0
  %368 = vmatprep.subr.mxu0 0.0
  %369 = vmatpush1.msra.mxu0 0.0
  %370 = vmatprep.subr.mxu0 0.0
  %371 = vmatpush1.msra.mxu0 0.0
  %372 = vmatprep.subr.mxu0 0.0
  %373 = vmatpush1.msra.mxu0 0.0
  %374 = vmatprep.subr.mxu0 0.0
  %375 = vmatpush1.msra.mxu0 0.0
  %376 = vmatprep.subr.mxu0 0.0
  %377 = vmatpush1.msra.mxu0 0.0
  %378 = vmatprep.subr.mxu0 0.0
  %379 = vmatpush1.msra.mxu0 0.0
  %380 = vmatprep.subr.mxu0 0.0
  %381 = vmatpush1.msra.mxu0 0.0
  %382 = vmatprep.subr.mxu0 0.0
  %383 = vmatpush1.msra.mxu0 0.0
  %384 = vmatprep.subr.mxu0 0.0
  %385 = vmatpush1.msra.mxu0 0.0
  %386 = vmatprep.subr.mxu0 0.0
  %387 = vmatpush1.msra.mxu0 0.0
  %388 = vmatprep.subr.mxu0 0.0
  %389 = vmatpush1.msra.mxu0 0.0
  %390 = vmatprep.subr.mxu0 0.0
  %391 = vmatpush1.msra.mxu0 0.0
  %392 = vmatprep.subr.mxu0 0.0
  %393 = vmatpush1.msra.mxu0 0.0
  %394 = vmatprep.subr.mxu0 0.0
  %395 = vmatpush1.msra.mxu0 0.0
  %396 = vmatprep.subr.mxu0 0.0
  %397 = vmatpush1.msra.mxu0 0.0
  %398 = vmatprep.subr.mxu0 0.0
  %399 = vmatpush1.msra.mxu0 0.0
  %400 = vmatprep.subr.mxu0 0.0
  %401 = vmatpush1.msra.mxu0 0.0
  %402 = vmatprep.subr.mxu0 0.0
  %403 = vmatpush1.msra.mxu0 0.0
  %404 = vmatprep.subr.mxu0 0.0
  %405 = vmatpush1.msra.mxu0 0.0
  %406 = vmatprep.subr.mxu0 0.0
  %407 = vmatpush1.msra.mxu0 0.0
  %408 = vmatprep.subr.mxu0 0.0
  %409 = vmatpush1.msra.mxu0 0.0
  %410 = vmatprep.subr.mxu0 0.0
  %411 = vmatpush1.msra.mxu0 0.0
  %412 = vmatprep.subr.mxu0 0.0
  %413 = vmatpush1.msra.mxu0 0.0
  %414 = vmatprep.subr.mxu0 0.0
  %415 = vmatpush1.msra.mxu0 0.0
  %416 = vmatprep.subr.mxu0 0.0
  %417 = vmatpush1.msra.mxu0 0.0
  %418 = vmatprep.mubr.f32.mxu0 0.0
  %419 = vmatmul.mubr.f32.gmra.mrb[0].mxu0 %v349
  %v420 = vpop.f32.mrb[0].mxu0
  %v421 = vadd.f32 0.0, %v420
  %v422 = vpop.f32.mrb[0].mxu0
  %423 = vdwg.mxu0
  %v424 = vadd.f32 %v421, %v331
  %v425 = vxor.u32 %v424, 2147483648
  %v426 = vmul.f32 %v425, 1.442695
  %v427 = vpow.pop %v426
  %v428 = vadd.f32 %v427, 1.0
  %v429 = vrcp.pop %v428
  %v430 = vmul.f32 1.0, %v429
  %v431 = vadd.f32 %v421, %v222
  %433 = vrot.lane.b32.xlu0 %v331, 64
  %v434 = vpop.permute.xlu0 %433
  %v436 = vmul.f32 %v430, %v434
  %438 = vrot.lane.b32.xlu0 %v436, 64
  %v439 = vpop.permute.xlu0 %438
  %v441 = vadd.f32 %v431, %v439
  %v442 = vtanh.pop %v441
  %v443 = vsub.f32 1.0, %v430
  %445 = vrot.lane.b32.xlu0 %v442, 96
  %v446 = vpop.permute.xlu0 %445
  %v448 = vmul.f32 %v443, %v446
  %v449 = vmul.f32 %v430, %v242
  %v450 = vadd.f32 %v448, %v449
  %vm451 = vcmask 517376
  %452 = vst.msk [vmem:[%s8] sm:$0x3] %vm451, %v450
  %v453 = vld [vmem:[%s5] sm:$0xff]
  %v454 = vld [vmem:[%s5 + $0x8] sm:$0xff]
  %v455 = vld [vmem:[%s5 + $0x10] sm:$0xff]
  %v456 = vld [vmem:[%s5 + $0x18] sm:$0xff]
  %458 = vrot.lane.b32.xlu0 %v450, 96
  %v459 = vpop.permute.xlu0 %458
  %v460 = vsel %vm53, %v459, 0
  %462 = vmatprep.subr.mxu0 0.0
  %463 = vmatpush1.msra.mxu0 %v453
  %464 = vmatprep.subr.mxu0 0.0
  %465 = vmatpush1.msra.mxu0 %v454
  %466 = vmatprep.subr.mxu0 0.0
  %467 = vmatpush1.msra.mxu0 %v455
  %468 = vmatprep.subr.mxu0 0.0
  %469 = vmatpush1.msra.mxu0 %v456
  %470 = vmatprep.subr.mxu0 0.0
  %471 = vmatpush1.msra.mxu0 0.0
  %472 = vmatprep.subr.mxu0 0.0
  %473 = vmatpush1.msra.mxu0 0.0
  %474 = vmatprep.subr.mxu0 0.0
  %475 = vmatpush1.msra.mxu0 0.0
  %476 = vmatprep.subr.mxu0 0.0
  %477 = vmatpush1.msra.mxu0 0.0
  %478 = vmatprep.subr.mxu0 0.0
  %479 = vmatpush1.msra.mxu0 0.0
  %480 = vmatprep.subr.mxu0 0.0
  %481 = vmatpush1.msra.mxu0 0.0
  %482 = vmatprep.subr.mxu0 0.0
  %483 = vmatpush1.msra.mxu0 0.0
  %484 = vmatprep.subr.mxu0 0.0
  %485 = vmatpush1.msra.mxu0 0.0
  %486 = vmatprep.subr.mxu0 0.0
  %487 = vmatpush1.msra.mxu0 0.0
  %488 = vmatprep.subr.mxu0 0.0
  %489 = vmatpush1.msra.mxu0 0.0
  %490 = vmatprep.subr.mxu0 0.0
  %491 = vmatpush1.msra.mxu0 0.0
  %492 = vmatprep.subr.mxu0 0.0
  %493 = vmatpush1.msra.mxu0 0.0
  %494 = vmatprep.subr.mxu0 0.0
  %495 = vmatpush1.msra.mxu0 0.0
  %496 = vmatprep.subr.mxu0 0.0
  %497 = vmatpush1.msra.mxu0 0.0
  %498 = vmatprep.subr.mxu0 0.0
  %499 = vmatpush1.msra.mxu0 0.0
  %500 = vmatprep.subr.mxu0 0.0
  %501 = vmatpush1.msra.mxu0 0.0
  %502 = vmatprep.subr.mxu0 0.0
  %503 = vmatpush1.msra.mxu0 0.0
  %504 = vmatprep.subr.mxu0 0.0
  %505 = vmatpush1.msra.mxu0 0.0
  %506 = vmatprep.subr.mxu0 0.0
  %507 = vmatpush1.msra.mxu0 0.0
  %508 = vmatprep.subr.mxu0 0.0
  %509 = vmatpush1.msra.mxu0 0.0
  %510 = vmatprep.subr.mxu0 0.0
  %511 = vmatpush1.msra.mxu0 0.0
  %512 = vmatprep.subr.mxu0 0.0
  %513 = vmatpush1.msra.mxu0 0.0
  %514 = vmatprep.subr.mxu0 0.0
  %515 = vmatpush1.msra.mxu0 0.0
  %516 = vmatprep.subr.mxu0 0.0
  %517 = vmatpush1.msra.mxu0 0.0
  %518 = vmatprep.subr.mxu0 0.0
  %519 = vmatpush1.msra.mxu0 0.0
  %520 = vmatprep.subr.mxu0 0.0
  %521 = vmatpush1.msra.mxu0 0.0
  %522 = vmatprep.subr.mxu0 0.0
  %523 = vmatpush1.msra.mxu0 0.0
  %524 = vmatprep.subr.mxu0 0.0
  %525 = vmatpush1.msra.mxu0 0.0
  %526 = vmatprep.mubr.f32.mxu0 0.0
  %527 = vmatmul.mubr.f32.gmra.mrb[0].mxu0 %v460
  %v528 = vpop.f32.mrb[0].mxu0
  %v529 = vadd.f32 %v39, %v528
  %v530 = vpop.f32.mrb[0].mxu0
  %531 = vdwg.mxu0
  %v532 = vxor.u32 %v529, 2147483648
  %v533 = vmul.f32 %v532, 1.442695
  %v534 = vpow.pop %v533
  %v535 = vadd.f32 %v534, 1.0
  %v536 = vrcp.pop %v535
  %v537 = vmul.f32 1.0, %v536
  %539 = vrot.lane.b32.xlu0 %v537, 40
  %v540 = vpop.permute.xlu0 %539
  %vm542 = vcmask 91200
  %543 = vst.msk [vmem:[%s7] sm:$0x3] %vm542, %v540
  %v544 = vld [vmem:[%s3] sm:$0xf]
  %545 = vrot.lane.b32.xlu0 %v537, 32
  %v546 = vpop.permute.xlu0 %545
  %v547 = vsel %vm136, %v546, 0
  %v550 = vsel %vm140, %v544, 0
  %552 = vmatprep.subr.mxu0 0.0
  %553 = vmatpush1.msra.mxu0 %v550
  %554 = vmatprep.subr.mxu0 0.0
  %555 = vmatpush1.msra.mxu0 0.0
  %556 = vmatprep.subr.mxu0 0.0
  %557 = vmatpush1.msra.mxu0 0.0
  %558 = vmatprep.subr.mxu0 0.0
  %559 = vmatpush1.msra.mxu0 0.0
  %560 = vmatprep.subr.mxu0 0.0
  %561 = vmatpush1.msra.mxu0 0.0
  %562 = vmatprep.subr.mxu0 0.0
  %563 = vmatpush1.msra.mxu0 0.0
  %564 = vmatprep.subr.mxu0 0.0
  %565 = vmatpush1.msra.mxu0 0.0
  %566 = vmatprep.subr.mxu0 0.0
  %567 = vmatpush1.msra.mxu0 0.0
  %568 = vmatprep.subr.mxu0 0.0
  %569 = vmatpush1.msra.mxu0 0.0
  %570 = vmatprep.subr.mxu0 0.0
  %571 = vmatpush1.msra.mxu0 0.0
  %572 = vmatprep.subr.mxu0 0.0
  %573 = vmatpush1.msra.mxu0 0.0
  %574 = vmatprep.subr.mxu0 0.0
  %575 = vmatpush1.msra.mxu0 0.0
  %576 = vmatprep.subr.mxu0 0.0
  %577 = vmatpush1.msra.mxu0 0.0
  %578 = vmatprep.subr.mxu0 0.0
  %579 = vmatpush1.msra.mxu0 0.0
  %580 = vmatprep.subr.mxu0 0.0
  %581 = vmatpush1.msra.mxu0 0.0
  %582 = vmatprep.subr.mxu0 0.0
  %583 = vmatpush1.msra.mxu0 0.0
  %584 = vmatprep.subr.mxu0 0.0
  %585 = vmatpush1.msra.mxu0 0.0
  %586 = vmatprep.subr.mxu0 0.0
  %587 = vmatpush1.msra.mxu0 0.0
  %588 = vmatprep.subr.mxu0 0.0
  %589 = vmatpush1.msra.mxu0 0.0
  %590 = vmatprep.subr.mxu0 0.0
  %591 = vmatpush1.msra.mxu0 0.0
  %592 = vmatprep.subr.mxu0 0.0
  %593 = vmatpush1.msra.mxu0 0.0
  %594 = vmatprep.subr.mxu0 0.0
  %595 = vmatpush1.msra.mxu0 0.0
  %596 = vmatprep.subr.mxu0 0.0
  %597 = vmatpush1.msra.mxu0 0.0
  %598 = vmatprep.subr.mxu0 0.0
  %599 = vmatpush1.msra.mxu0 0.0
  %600 = vmatprep.subr.mxu0 0.0
  %601 = vmatpush1.msra.mxu0 0.0
  %602 = vmatprep.subr.mxu0 0.0
  %603 = vmatpush1.msra.mxu0 0.0
  %604 = vmatprep.subr.mxu0 0.0
  %605 = vmatpush1.msra.mxu0 0.0
  %606 = vmatprep.subr.mxu0 0.0
  %607 = vmatpush1.msra.mxu0 0.0
  %608 = vmatprep.subr.mxu0 0.0
  %609 = vmatpush1.msra.mxu0 0.0
  %610 = vmatprep.subr.mxu0 0.0
  %611 = vmatpush1.msra.mxu0 0.0
  %612 = vmatprep.subr.mxu0 0.0
  %613 = vmatpush1.msra.mxu0 0.0
  %614 = vmatprep.subr.mxu0 0.0
  %615 = vmatpush1.msra.mxu0 0.0
  %616 = vmatprep.mubr.f32.mxu0 0.0
  %617 = vmatmul.mubr.f32.gmra.mrb[0].mxu0 %v547
  %v618 = vpop.f32.mrb[0].mxu0
  %v619 = vadd.f32 0.0, %v618
  %v620 = vpop.f32.mrb[0].mxu0
  %621 = vdwg.mxu0
  %v622 = vadd.f32 %v619, %v529
  %v623 = vxor.u32 %v622, 2147483648
  %v624 = vmul.f32 %v623, 1.442695
  %v625 = vpow.pop %v624
  %v626 = vadd.f32 %v625, 1.0
  %v627 = vrcp.pop %v626
  %v628 = vmul.f32 1.0, %v627
  %v629 = vadd.f32 %v619, %v222
  %631 = vrot.lane.b32.xlu0 %v529, 64
  %v632 = vpop.permute.xlu0 %631
  %v634 = vmul.f32 %v628, %v632
  %636 = vrot.lane.b32.xlu0 %v634, 64
  %v637 = vpop.permute.xlu0 %636
  %v639 = vadd.f32 %v629, %v637
  %v640 = vtanh.pop %v639
  %v641 = vsub.f32 1.0, %v628
  %643 = vrot.lane.b32.xlu0 %v640, 96
  %v644 = vpop.permute.xlu0 %643
  %v646 = vmul.f32 %v641, %v644
  %v647 = vmul.f32 %v628, %v450
  %v648 = vadd.f32 %v646, %v647
  %v651 = vunpack.c.l.s4 1983009808
  %v652 = vunpack.c.0.s8 %v651
  %v653 = vlaneseq
  %v654 = vshrl.u32 %v653, 7
  %v655 = vsub.s32 %v652, %v654
  %v656 = vrot.slane %v648, %v655
  %657 = vrot.lane.b32.xlu0 %v656, 32
  %v658 = vpop.permute.xlu0 %657
  %vm660 = vcmask 779776
  %661 = vst.msk [vmem:[%s8] sm:$0x3] %vm660, %v658
  %v662 = vld [vmem:[%s5] sm:$0xff]
  %v663 = vld [vmem:[%s5 + $0x8] sm:$0xff]
  %v664 = vld [vmem:[%s5 + $0x10] sm:$0xff]
  %v665 = vld [vmem:[%s5 + $0x18] sm:$0xff]
  %666 = vrot.lane.b32.xlu0 %v648, 96
  %v667 = vpop.permute.xlu0 %666
  %v668 = vsel %vm53, %v667, 0
  %670 = vmatprep.subr.mxu0 0.0
  %671 = vmatpush1.msra.mxu0 %v662
  %672 = vmatprep.subr.mxu0 0.0
  %673 = vmatpush1.msra.mxu0 %v663
  %674 = vmatprep.subr.mxu0 0.0
  %675 = vmatpush1.msra.mxu0 %v664
  %676 = vmatprep.subr.mxu0 0.0
  %677 = vmatpush1.msra.mxu0 %v665
  %678 = vmatprep.subr.mxu0 0.0
  %679 = vmatpush1.msra.mxu0 0.0
  %680 = vmatprep.subr.mxu0 0.0
  %681 = vmatpush1.msra.mxu0 0.0
  %682 = vmatprep.subr.mxu0 0.0
  %683 = vmatpush1.msra.mxu0 0.0
  %684 = vmatprep.subr.mxu0 0.0
  %685 = vmatpush1.msra.mxu0 0.0
  %686 = vmatprep.subr.mxu0 0.0
  %687 = vmatpush1.msra.mxu0 0.0
  %688 = vmatprep.subr.mxu0 0.0
  %689 = vmatpush1.msra.mxu0 0.0
  %690 = vmatprep.subr.mxu0 0.0
  %691 = vmatpush1.msra.mxu0 0.0
  %692 = vmatprep.subr.mxu0 0.0
  %693 = vmatpush1.msra.mxu0 0.0
  %694 = vmatprep.subr.mxu0 0.0
  %695 = vmatpush1.msra.mxu0 0.0
  %696 = vmatprep.subr.mxu0 0.0
  %697 = vmatpush1.msra.mxu0 0.0
  %698 = vmatprep.subr.mxu0 0.0
  %699 = vmatpush1.msra.mxu0 0.0
  %700 = vmatprep.subr.mxu0 0.0
  %701 = vmatpush1.msra.mxu0 0.0
  %702 = vmatprep.subr.mxu0 0.0
  %703 = vmatpush1.msra.mxu0 0.0
  %704 = vmatprep.subr.mxu0 0.0
  %705 = vmatpush1.msra.mxu0 0.0
  %706 = vmatprep.subr.mxu0 0.0
  %707 = vmatpush1.msra.mxu0 0.0
  %708 = vmatprep.subr.mxu0 0.0
  %709 = vmatpush1.msra.mxu0 0.0
  %710 = vmatprep.subr.mxu0 0.0
  %711 = vmatpush1.msra.mxu0 0.0
  %712 = vmatprep.subr.mxu0 0.0
  %713 = vmatpush1.msra.mxu0 0.0
  %714 = vmatprep.subr.mxu0 0.0
  %715 = vmatpush1.msra.mxu0 0.0
  %716 = vmatprep.subr.mxu0 0.0
  %717 = vmatpush1.msra.mxu0 0.0
  %718 = vmatprep.subr.mxu0 0.0
  %719 = vmatpush1.msra.mxu0 0.0
  %720 = vmatprep.subr.mxu0 0.0
  %721 = vmatpush1.msra.mxu0 0.0
  %722 = vmatprep.subr.mxu0 0.0
  %723 = vmatpush1.msra.mxu0 0.0
  %724 = vmatprep.subr.mxu0 0.0
  %725 = vmatpush1.msra.mxu0 0.0
  %726 = vmatprep.subr.mxu0 0.0
  %727 = vmatpush1.msra.mxu0 0.0
  %728 = vmatprep.subr.mxu0 0.0
  %729 = vmatpush1.msra.mxu0 0.0
  %730 = vmatprep.subr.mxu0 0.0
  %731 = vmatpush1.msra.mxu0 0.0
  %732 = vmatprep.subr.mxu0 0.0
  %733 = vmatpush1.msra.mxu0 0.0
  %734 = vmatprep.mubr.f32.mxu0 0.0
  %735 = vmatmul.mubr.f32.gmra.mrb[0].mxu0 %v668
  %v736 = vpop.f32.mrb[0].mxu0
  %v737 = vadd.f32 %v39, %v736
  %v738 = vpop.f32.mrb[0].mxu0
  %739 = vdwg.mxu0
  %v740 = vxor.u32 %v737, 2147483648
  %v741 = vmul.f32 %v740, 1.442695
  %v742 = vpow.pop %v741
  %v743 = vadd.f32 %v742, 1.0
  %v744 = vrcp.pop %v743
  %v745 = vmul.f32 1.0, %v744
  %747 = vrot.lane.b32.xlu0 %v745, 44
  %v748 = vpop.permute.xlu0 %747
  %vm750 = vcmask 124000
  %751 = vst.msk [vmem:[%s7] sm:$0x3] %vm750, %v748
  %v752 = vld [vmem:[%s3] sm:$0xf]
  %753 = vrot.lane.b32.xlu0 %v745, 32
  %v754 = vpop.permute.xlu0 %753
  %v755 = vsel %vm136, %v754, 0
  %v758 = vsel %vm140, %v752, 0
  %760 = vmatprep.subr.mxu0 0.0
  %761 = vmatpush1.msra.mxu0 %v758
  %762 = vmatprep.subr.mxu0 0.0
  %763 = vmatpush1.msra.mxu0 0.0
  %764 = vmatprep.subr.mxu0 0.0
  %765 = vmatpush1.msra.mxu0 0.0
  %766 = vmatprep.subr.mxu0 0.0
  %767 = vmatpush1.msra.mxu0 0.0
  %768 = vmatprep.subr.mxu0 0.0
  %769 = vmatpush1.msra.mxu0 0.0
  %770 = vmatprep.subr.mxu0 0.0
  %771 = vmatpush1.msra.mxu0 0.0
  %772 = vmatprep.subr.mxu0 0.0
  %773 = vmatpush1.msra.mxu0 0.0
  %774 = vmatprep.subr.mxu0 0.0
  %775 = vmatpush1.msra.mxu0 0.0
  %776 = vmatprep.subr.mxu0 0.0
  %777 = vmatpush1.msra.mxu0 0.0
  %778 = vmatprep.subr.mxu0 0.0
  %779 = vmatpush1.msra.mxu0 0.0
  %780 = vmatprep.subr.mxu0 0.0
  %781 = vmatpush1.msra.mxu0 0.0
  %782 = vmatprep.subr.mxu0 0.0
  %783 = vmatpush1.msra.mxu0 0.0
  %784 = vmatprep.subr.mxu0 0.0
  %785 = vmatpush1.msra.mxu0 0.0
  %786 = vmatprep.subr.mxu0 0.0
  %787 = vmatpush1.msra.mxu0 0.0
  %788 = vmatprep.subr.mxu0 0.0
  %789 = vmatpush1.msra.mxu0 0.0
  %790 = vmatprep.subr.mxu0 0.0
  %791 = vmatpush1.msra.mxu0 0.0
  %792 = vmatprep.subr.mxu0 0.0
  %793 = vmatpush1.msra.mxu0 0.0
  %794 = vmatprep.subr.mxu0 0.0
  %795 = vmatpush1.msra.mxu0 0.0
  %796 = vmatprep.subr.mxu0 0.0
  %797 = vmatpush1.msra.mxu0 0.0
  %798 = vmatprep.subr.mxu0 0.0
  %799 = vmatpush1.msra.mxu0 0.0
  %800 = vmatprep.subr.mxu0 0.0
  %801 = vmatpush1.msra.mxu0 0.0
  %802 = vmatprep.subr.mxu0 0.0
  %803 = vmatpush1.msra.mxu0 0.0
  %804 = vmatprep.subr.mxu0 0.0
  %805 = vmatpush1.msra.mxu0 0.0
  %806 = vmatprep.subr.mxu0 0.0
  %807 = vmatpush1.msra.mxu0 0.0
  %808 = vmatprep.subr.mxu0 0.0
  %809 = vmatpush1.msra.mxu0 0.0
  %810 = vmatprep.subr.mxu0 0.0
  %811 = vmatpush1.msra.mxu0 0.0
  %812 = vmatprep.subr.mxu0 0.0
  %813 = vmatpush1.msra.mxu0 0.0
  %814 = vmatprep.subr.mxu0 0.0
  %815 = vmatpush1.msra.mxu0 0.0
  %816 = vmatprep.subr.mxu0 0.0
  %817 = vmatpush1.msra.mxu0 0.0
  %818 = vmatprep.subr.mxu0 0.0
  %819 = vmatpush1.msra.mxu0 0.0
  %820 = vmatprep.subr.mxu0 0.0
  %821 = vmatpush1.msra.mxu0 0.0
  %822 = vmatprep.subr.mxu0 0.0
  %823 = vmatpush1.msra.mxu0 0.0
  %824 = vmatprep.mubr.f32.mxu0 0.0
  %825 = vmatmul.mubr.f32.gmra.mrb[0].mxu0 %v755
  %v826 = vpop.f32.mrb[0].mxu0
  %v827 = vadd.f32 0.0, %v826
  %v828 = vpop.f32.mrb[0].mxu0
  %829 = vdwg.mxu0
  %v830 = vadd.f32 %v827, %v737
  %v831 = vxor.u32 %v830, 2147483648
  %v832 = vmul.f32 %v831, 1.442695
  %v833 = vpow.pop %v832
  %v834 = vadd.f32 %v833, 1.0
  %v835 = vrcp.pop %v834
  %v836 = vmul.f32 1.0, %v835
  %v837 = vadd.f32 %v827, %v222
  %839 = vrot.lane.b32.xlu0 %v737, 64
  %v840 = vpop.permute.xlu0 %839
  %v842 = vmul.f32 %v836, %v840
  %844 = vrot.lane.b32.xlu0 %v842, 64
  %v845 = vpop.permute.xlu0 %844
  %v847 = vadd.f32 %v837, %v845
  %v848 = vtanh.pop %v847
  %v849 = vsub.f32 1.0, %v836
  %851 = vrot.lane.b32.xlu0 %v848, 96
  %v852 = vpop.permute.xlu0 %851
  %v854 = vmul.f32 %v849, %v852
  %v855 = vmul.f32 %v836, %v648
  %v856 = vadd.f32 %v854, %v855
  %v859 = vunpack.c.l.s4 1983009808
  %v860 = vunpack.c.0.s8 %v859
  %v861 = vlaneseq
  %v862 = vshrl.u32 %v861, 7
  %v863 = vsub.s32 %v860, %v862
  %v864 = vrot.slane %v856, %v863
  %865 = vrot.lane.b32.xlu0 %v864, 64
  %v866 = vpop.permute.xlu0 %865
  %vm868 = vcmask 1042176
  %869 = vst.msk [vmem:[%s8] sm:$0x3] %vm868, %v866
  %v870 = vld [vmem:[%s5] sm:$0xff]
  %v871 = vld [vmem:[%s5 + $0x8] sm:$0xff]
  %v872 = vld [vmem:[%s5 + $0x10] sm:$0xff]
  %v873 = vld [vmem:[%s5 + $0x18] sm:$0xff]
  %874 = vrot.lane.b32.xlu0 %v856, 96
  %v875 = vpop.permute.xlu0 %874
  %v876 = vsel %vm53, %v875, 0
  %878 = vmatprep.subr.mxu0 0.0
  %879 = vmatpush1.msra.mxu0 %v870
  %880 = vmatprep.subr.mxu0 0.0
  %881 = vmatpush1.msra.mxu0 %v871
  %882 = vmatprep.subr.mxu0 0.0
  %883 = vmatpush1.msra.mxu0 %v872
  %884 = vmatprep.subr.mxu0 0.0
  %885 = vmatpush1.msra.mxu0 %v873
  %886 = vmatprep.subr.mxu0 0.0
  %887 = vmatpush1.msra.mxu0 0.0
  %888 = vmatprep.subr.mxu0 0.0
  %889 = vmatpush1.msra.mxu0 0.0
  %890 = vmatprep.subr.mxu0 0.0
  %891 = vmatpush1.msra.mxu0 0.0
  %892 = vmatprep.subr.mxu0 0.0
  %893 = vmatpush1.msra.mxu0 0.0
  %894 = vmatprep.subr.mxu0 0.0
  %895 = vmatpush1.msra.mxu0 0.0
  %896 = vmatprep.subr.mxu0 0.0
  %897 = vmatpush1.msra.mxu0 0.0
  %898 = vmatprep.subr.mxu0 0.0
  %899 = vmatpush1.msra.mxu0 0.0
  %900 = vmatprep.subr.mxu0 0.0
  %901 = vmatpush1.msra.mxu0 0.0
  %902 = vmatprep.subr.mxu0 0.0
  %903 = vmatpush1.msra.mxu0 0.0
  %904 = vmatprep.subr.mxu0 0.0
  %905 = vmatpush1.msra.mxu0 0.0
  %906 = vmatprep.subr.mxu0 0.0
  %907 = vmatpush1.msra.mxu0 0.0
  %908 = vmatprep.subr.mxu0 0.0
  %909 = vmatpush1.msra.mxu0 0.0
  %910 = vmatprep.subr.mxu0 0.0
  %911 = vmatpush1.msra.mxu0 0.0
  %912 = vmatprep.subr.mxu0 0.0
  %913 = vmatpush1.msra.mxu0 0.0
  %914 = vmatprep.subr.mxu0 0.0
  %915 = vmatpush1.msra.mxu0 0.0
  %916 = vmatprep.subr.mxu0 0.0
  %917 = vmatpush1.msra.mxu0 0.0
  %918 = vmatprep.subr.mxu0 0.0
  %919 = vmatpush1.msra.mxu0 0.0
  %920 = vmatprep.subr.mxu0 0.0
  %921 = vmatpush1.msra.mxu0 0.0
  %922 = vmatprep.subr.mxu0 0.0
  %923 = vmatpush1.msra.mxu0 0.0
  %924 = vmatprep.subr.mxu0 0.0
  %925 = vmatpush1.msra.mxu0 0.0
  %926 = vmatprep.subr.mxu0 0.0
  %927 = vmatpush1.msra.mxu0 0.0
  %928 = vmatprep.subr.mxu0 0.0
  %929 = vmatpush1.msra.mxu0 0.0
  %930 = vmatprep.subr.mxu0 0.0
  %931 = vmatpush1.msra.mxu0 0.0
  %932 = vmatprep.subr.mxu0 0.0
  %933 = vmatpush1.msra.mxu0 0.0
  %934 = vmatprep.subr.mxu0 0.0
  %935 = vmatpush1.msra.mxu0 0.0
  %936 = vmatprep.subr.mxu0 0.0
  %937 = vmatpush1.msra.mxu0 0.0
  %938 = vmatprep.subr.mxu0 0.0
  %939 = vmatpush1.msra.mxu0 0.0
  %940 = vmatprep.subr.mxu0 0.0
  %941 = vmatpush1.msra.mxu0 0.0
  %942 = vmatprep.mubr.f32.mxu0 0.0
  %943 = vmatmul.mubr.f32.gmra.mrb[0].mxu0 %v876
  %v944 = vpop.f32.mrb[0].mxu0
  %v945 = vadd.f32 %v39, %v944
  %v946 = vpop.f32.mrb[0].mxu0
  %947 = vdwg.mxu0
  %v948 = vxor.u32 %v945, 2147483648
  %v949 = vmul.f32 %v948, 1.442695
  %v950 = vpow.pop %v949
  %v951 = vadd.f32 %v950, 1.0
  %v952 = vrcp.pop %v951
  %v953 = vmul.f32 1.0, %v952
  %955 = vrot.lane.b32.xlu0 %v953, 48
  %v956 = vpop.permute.xlu0 %955
  %vm958 = vcmask 156800
  %959 = vst.msk [vmem:[%s7] sm:$0x3] %vm958, %v956
  %v960 = vld [vmem:[%s3] sm:$0xf]
  %961 = vrot.lane.b32.xlu0 %v953, 32
  %v962 = vpop.permute.xlu0 %961
  %v963 = vsel %vm136, %v962, 0
  %v966 = vsel %vm140, %v960, 0
  %968 = vmatprep.subr.mxu0 0.0
  %969 = vmatpush1.msra.mxu0 %v966
  %970 = vmatprep.subr.mxu0 0.0
  %971 = vmatpush1.msra.mxu0 0.0
  %972 = vmatprep.subr.mxu0 0.0
  %973 = vmatpush1.msra.mxu0 0.0
  %974 = vmatprep.subr.mxu0 0.0
  %975 = vmatpush1.msra.mxu0 0.0
  %976 = vmatprep.subr.mxu0 0.0
  %977 = vmatpush1.msra.mxu0 0.0
  %978 = vmatprep.subr.mxu0 0.0
  %979 = vmatpush1.msra.mxu0 0.0
  %980 = vmatprep.subr.mxu0 0.0
  %981 = vmatpush1.msra.mxu0 0.0
  %982 = vmatprep.subr.mxu0 0.0
  %983 = vmatpush1.msra.mxu0 0.0
  %984 = vmatprep.subr.mxu0 0.0
  %985 = vmatpush1.msra.mxu0 0.0
  %986 = vmatprep.subr.mxu0 0.0
  %987 = vmatpush1.msra.mxu0 0.0
  %988 = vmatprep.subr.mxu0 0.0
  %989 = vmatpush1.msra.mxu0 0.0
  %990 = vmatprep.subr.mxu0 0.0
  %991 = vmatpush1.msra.mxu0 0.0
  %992 = vmatprep.subr.mxu0 0.0
  %993 = vmatpush1.msra.mxu0 0.0
  %994 = vmatprep.subr.mxu0 0.0
  %995 = vmatpush1.msra.mxu0 0.0
  %996 = vmatprep.subr.mxu0 0.0
  %997 = vmatpush1.msra.mxu0 0.0
  %998 = vmatprep.subr.mxu0 0.0
  %999 = vmatpush1.msra.mxu0 0.0
  %1000 = vmatprep.subr.mxu0 0.0
  %1001 = vmatpush1.msra.mxu0 0.0
  %1002 = vmatprep.subr.mxu0 0.0
  %1003 = vmatpush1.msra.mxu0 0.0
  %1004 = vmatprep.subr.mxu0 0.0
  %1005 = vmatpush1.msra.mxu0 0.0
  %1006 = vmatprep.subr.mxu0 0.0
  %1007 = vmatpush1.msra.mxu0 0.0
  %1008 = vmatprep.subr.mxu0 0.0
  %1009 = vmatpush1.msra.mxu0 0.0
  %1010 = vmatprep.subr.mxu0 0.0
  %1011 = vmatpush1.msra.mxu0 0.0
  %1012 = vmatprep.subr.mxu0 0.0
  %1013 = vmatpush1.msra.mxu0 0.0
  %1014 = vmatprep.subr.mxu0 0.0
  %1015 = vmatpush1.msra.mxu0 0.0
  %1016 = vmatprep.subr.mxu0 0.0
  %1017 = vmatpush1.msra.mxu0 0.0
  %1018 = vmatprep.subr.mxu0 0.0
  %1019 = vmatpush1.msra.mxu0 0.0
  %1020 = vmatprep.subr.mxu0 0.0
  %1021 = vmatpush1.msra.mxu0 0.0
  %1022 = vmatprep.subr.mxu0 0.0
  %1023 = vmatpush1.msra.mxu0 0.0
  %1024 = vmatprep.subr.mxu0 0.0
  %1025 = vmatpush1.msra.mxu0 0.0
  %1026 = vmatprep.subr.mxu0 0.0
  %1027 = vmatpush1.msra.mxu0 0.0
  %1028 = vmatprep.subr.mxu0 0.0
  %1029 = vmatpush1.msra.mxu0 0.0
  %1030 = vmatprep.subr.mxu0 0.0
  %1031 = vmatpush1.msra.mxu0 0.0
  %1032 = vmatprep.mubr.f32.mxu0 0.0
  %1033 = vmatmul.mubr.f32.gmra.mrb[0].mxu0 %v963
  %v1034 = vpop.f32.mrb[0].mxu0
  %v1035 = vadd.f32 0.0, %v1034
  %v1036 = vpop.f32.mrb[0].mxu0
  %1037 = vdwg.mxu0
  %v1038 = vadd.f32 %v1035, %v945
  %v1039 = vxor.u32 %v1038, 2147483648
  %v1040 = vmul.f32 %v1039, 1.442695
  %v1041 = vpow.pop %v1040
  %v1042 = vadd.f32 %v1041, 1.0
  %v1043 = vrcp.pop %v1042
  %v1044 = vmul.f32 1.0, %v1043
  %v1045 = vadd.f32 %v1035, %v222
  %1047 = vrot.lane.b32.xlu0 %v945, 64
  %v1048 = vpop.permute.xlu0 %1047
  %v1050 = vmul.f32 %v1044, %v1048
  %1052 = vrot.lane.b32.xlu0 %v1050, 64
  %v1053 = vpop.permute.xlu0 %1052
  %v1055 = vadd.f32 %v1045, %v1053
  %v1056 = vtanh.pop %v1055
  %v1057 = vsub.f32 1.0, %v1044
  %1059 = vrot.lane.b32.xlu0 %v1056, 96
  %v1060 = vpop.permute.xlu0 %1059
  %v1062 = vmul.f32 %v1057, %v1060
  %v1063 = vmul.f32 %v1044, %v856
  %v1064 = vadd.f32 %v1062, %v1063
  %v1067 = vunpack.c.l.s4 1983009808
  %v1068 = vunpack.c.0.s8 %v1067
  %v1069 = vlaneseq
  %v1070 = vshrl.u32 %v1069, 7
  %v1071 = vsub.s32 %v1068, %v1070
  %v1072 = vrot.slane %v1064, %v1071
  %1073 = vrot.lane.b32.xlu0 %v1072, 96
  %v1074 = vpop.permute.xlu0 %1073
  %1076 = vst.msk [vmem:[%s8 + $0x2] sm:$0x3] %vm254, %v1074
  %v1077 = vld [vmem:[%s5] sm:$0xff]
  %v1078 = vld [vmem:[%s5 + $0x8] sm:$0xff]
  %v1079 = vld [vmem:[%s5 + $0x10] sm:$0xff]
  %v1080 = vld [vmem:[%s5 + $0x18] sm:$0xff]
  %1081 = vrot.lane.b32.xlu0 %v1064, 96
  %v1082 = vpop.permute.xlu0 %1081
  %v1083 = vsel %vm53, %v1082, 0
  %1085 = vmatprep.subr.mxu0 0.0
  %1086 = vmatpush1.msra.mxu0 %v1077
  %1087 = vmatprep.subr.mxu0 0.0
  %1088 = vmatpush1.msra.mxu0 %v1078
  %1089 = vmatprep.subr.mxu0 0.0
  %1090 = vmatpush1.msra.mxu0 %v1079
  %1091 = vmatprep.subr.mxu0 0.0
  %1092 = vmatpush1.msra.mxu0 %v1080
  %1093 = vmatprep.subr.mxu0 0.0
  %1094 = vmatpush1.msra.mxu0 0.0
  %1095 = vmatprep.subr.mxu0 0.0
  %1096 = vmatpush1.msra.mxu0 0.0
  %1097 = vmatprep.subr.mxu0 0.0
  %1098 = vmatpush1.msra.mxu0 0.0
  %1099 = vmatprep.subr.mxu0 0.0
  %1100 = vmatpush1.msra.mxu0 0.0
  %1101 = vmatprep.subr.mxu0 0.0
  %1102 = vmatpush1.msra.mxu0 0.0
  %1103 = vmatprep.subr.mxu0 0.0
  %1104 = vmatpush1.msra.mxu0 0.0
  %1105 = vmatprep.subr.mxu0 0.0
  %1106 = vmatpush1.msra.mxu0 0.0
  %1107 = vmatprep.subr.mxu0 0.0
  %1108 = vmatpush1.msra.mxu0 0.0
  %1109 = vmatprep.subr.mxu0 0.0
  %1110 = vmatpush1.msra.mxu0 0.0
  %1111 = vmatprep.subr.mxu0 0.0
  %1112 = vmatpush1.msra.mxu0 0.0
  %1113 = vmatprep.subr.mxu0 0.0
  %1114 = vmatpush1.msra.mxu0 0.0
  %1115 = vmatprep.subr.mxu0 0.0
  %1116 = vmatpush1.msra.mxu0 0.0
  %1117 = vmatprep.subr.mxu0 0.0
  %1118 = vmatpush1.msra.mxu0 0.0
  %1119 = vmatprep.subr.mxu0 0.0
  %1120 = vmatpush1.msra.mxu0 0.0
  %1121 = vmatprep.subr.mxu0 0.0
  %1122 = vmatpush1.msra.mxu0 0.0
  %1123 = vmatprep.subr.mxu0 0.0
  %1124 = vmatpush1.msra.mxu0 0.0
  %1125 = vmatprep.subr.mxu0 0.0
  %1126 = vmatpush1.msra.mxu0 0.0
  %1127 = vmatprep.subr.mxu0 0.0
  %1128 = vmatpush1.msra.mxu0 0.0
  %1129 = vmatprep.subr.mxu0 0.0
  %1130 = vmatpush1.msra.mxu0 0.0
  %1131 = vmatprep.subr.mxu0 0.0
  %1132 = vmatpush1.msra.mxu0 0.0
  %1133 = vmatprep.subr.mxu0 0.0
  %1134 = vmatpush1.msra.mxu0 0.0
  %1135 = vmatprep.subr.mxu0 0.0
  %1136 = vmatpush1.msra.mxu0 0.0
  %1137 = vmatprep.subr.mxu0 0.0
  %1138 = vmatpush1.msra.mxu0 0.0
  %1139 = vmatprep.subr.mxu0 0.0
  %1140 = vmatpush1.msra.mxu0 0.0
  %1141 = vmatprep.subr.mxu0 0.0
  %1142 = vmatpush1.msra.mxu0 0.0
  %1143 = vmatprep.subr.mxu0 0.0
  %1144 = vmatpush1.msra.mxu0 0.0
  %1145 = vmatprep.subr.mxu0 0.0
  %1146 = vmatpush1.msra.mxu0 0.0
  %1147 = vmatprep.subr.mxu0 0.0
  %1148 = vmatpush1.msra.mxu0 0.0
  %1149 = vmatprep.mubr.f32.mxu0 0.0
  %1150 = vmatmul.mubr.f32.gmra.mrb[0].mxu0 %v1083
  %v1151 = vpop.f32.mrb[0].mxu0
  %v1152 = vadd.f32 %v39, %v1151
  %v1153 = vpop.f32.mrb[0].mxu0
  %1154 = vdwg.mxu0
  %v1155 = vxor.u32 %v1152, 2147483648
  %v1156 = vmul.f32 %v1155, 1.442695
  %v1157 = vpow.pop %v1156
  %v1158 = vadd.f32 %v1157, 1.0
  %v1159 = vrcp.pop %v1158
  %v1160 = vmul.f32 1.0, %v1159
  %1162 = vrot.lane.b32.xlu0 %v1160, 52
  %v1163 = vpop.permute.xlu0 %1162
  %vm1165 = vcmask 189600
  %1166 = vst.msk [vmem:[%s7] sm:$0x3] %vm1165, %v1163
  %v1167 = vld [vmem:[%s3] sm:$0xf]
  %1168 = vrot.lane.b32.xlu0 %v1160, 32
  %v1169 = vpop.permute.xlu0 %1168
  %v1170 = vsel %vm136, %v1169, 0
  %v1173 = vsel %vm140, %v1167, 0
  %1175 = vmatprep.subr.mxu0 0.0
  %1176 = vmatpush1.msra.mxu0 %v1173
  %1177 = vmatprep.subr.mxu0 0.0
  %1178 = vmatpush1.msra.mxu0 0.0
  %1179 = vmatprep.subr.mxu0 0.0
  %1180 = vmatpush1.msra.mxu0 0.0
  %1181 = vmatprep.subr.mxu0 0.0
  %1182 = vmatpush1.msra.mxu0 0.0
  %1183 = vmatprep.subr.mxu0 0.0
  %1184 = vmatpush1.msra.mxu0 0.0
  %1185 = vmatprep.subr.mxu0 0.0
  %1186 = vmatpush1.msra.mxu0 0.0
  %1187 = vmatprep.subr.mxu0 0.0
  %1188 = vmatpush1.msra.mxu0 0.0
  %1189 = vmatprep.subr.mxu0 0.0
  %1190 = vmatpush1.msra.mxu0 0.0
  %1191 = vmatprep.subr.mxu0 0.0
  %1192 = vmatpush1.msra.mxu0 0.0
  %1193 = vmatprep.subr.mxu0 0.0
  %1194 = vmatpush1.msra.mxu0 0.0
  %1195 = vmatprep.subr.mxu0 0.0
  %1196 = vmatpush1.msra.mxu0 0.0
  %1197 = vmatprep.subr.mxu0 0.0
  %1198 = vmatpush1.msra.mxu0 0.0
  %1199 = vmatprep.subr.mxu0 0.0
  %1200 = vmatpush1.msra.mxu0 0.0
  %1201 = vmatprep.subr.mxu0 0.0
  %1202 = vmatpush1.msra.mxu0 0.0
  %1203 = vmatprep.subr.mxu0 0.0
  %1204 = vmatpush1.msra.mxu0 0.0
  %1205 = vmatprep.subr.mxu0 0.0
  %1206 = vmatpush1.msra.mxu0 0.0
  %1207 = vmatprep.subr.mxu0 0.0
  %1208 = vmatpush1.msra.mxu0 0.0
  %1209 = vmatprep.subr.mxu0 0.0
  %1210 = vmatpush1.msra.mxu0 0.0
  %1211 = vmatprep.subr.mxu0 0.0
  %1212 = vmatpush1.msra.mxu0 0.0
  %1213 = vmatprep.subr.mxu0 0.0
  %1214 = vmatpush1.msra.mxu0 0.0
  %1215 = vmatprep.subr.mxu0 0.0
  %1216 = vmatpush1.msra.mxu0 0.0
  %1217 = vmatprep.subr.mxu0 0.0
  %1218 = vmatpush1.msra.mxu0 0.0
  %1219 = vmatprep.subr.mxu0 0.0
  %1220 = vmatpush1.msra.mxu0 0.0
  %1221 = vmatprep.subr.mxu0 0.0
  %1222 = vmatpush1.msra.mxu0 0.0
  %1223 = vmatprep.subr.mxu0 0.0
  %1224 = vmatpush1.msra.mxu0 0.0
  %1225 = vmatprep.subr.mxu0 0.0
  %1226 = vmatpush1.msra.mxu0 0.0
  %1227 = vmatprep.subr.mxu0 0.0
  %1228 = vmatpush1.msra.mxu0 0.0
  %1229 = vmatprep.subr.mxu0 0.0
  %1230 = vmatpush1.msra.mxu0 0.0
  %1231 = vmatprep.subr.mxu0 0.0
  %1232 = vmatpush1.msra.mxu0 0.0
  %1233 = vmatprep.subr.mxu0 0.0
  %1234 = vmatpush1.msra.mxu0 0.0
  %1235 = vmatprep.subr.mxu0 0.0
  %1236 = vmatpush1.msra.mxu0 0.0
  %1237 = vmatprep.subr.mxu0 0.0
  %1238 = vmatpush1.msra.mxu0 0.0
  %1239 = vmatprep.mubr.f32.mxu0 0.0
  %1240 = vmatmul.mubr.f32.gmra.mrb[0].mxu0 %v1170
  %v1241 = vpop.f32.mrb[0].mxu0
  %v1242 = vadd.f32 0.0, %v1241
  %v1243 = vpop.f32.mrb[0].mxu0
  %1244 = vdwg.mxu0
  %v1245 = vadd.f32 %v1242, %v1152
  %v1246 = vxor.u32 %v1245, 2147483648
  %v1247 = vmul.f32 %v1246, 1.442695
  %v1248 = vpow.pop %v1247
  %v1249 = vadd.f32 %v1248, 1.0
  %v1250 = vrcp.pop %v1249
  %v1251 = vmul.f32 1.0, %v1250
  %v1252 = vadd.f32 %v1242, %v222
  %1254 = vrot.lane.b32.xlu0 %v1152, 64
  %v1255 = vpop.permute.xlu0 %1254
  %v1257 = vmul.f32 %v1251, %v1255
  %1259 = vrot.lane.b32.xlu0 %v1257, 64
  %v1260 = vpop.permute.xlu0 %1259
  %v1262 = vadd.f32 %v1252, %v1260
  %v1263 = vtanh.pop %v1262
  %v1264 = vsub.f32 1.0, %v1251
  %1266 = vrot.lane.b32.xlu0 %v1263, 96
  %v1267 = vpop.permute.xlu0 %1266
  %v1269 = vmul.f32 %v1264, %v1267
  %v1270 = vmul.f32 %v1251, %v1064
  %v1271 = vadd.f32 %v1269, %v1270
  %1272 = vst.msk [vmem:[%s8 + $0x2] sm:$0x3] %vm451, %v1271
  %v1273 = vld [vmem:[%s5] sm:$0xff]
  %v1274 = vld [vmem:[%s5 + $0x8] sm:$0xff]
  %v1275 = vld [vmem:[%s5 + $0x10] sm:$0xff]
  %v1276 = vld [vmem:[%s5 + $0x18] sm:$0xff]
  %1278 = vrot.lane.b32.xlu0 %v1271, 96
  %v1279 = vpop.permute.xlu0 %1278
  %v1280 = vsel %vm53, %v1279, 0
  %1282 = vmatprep.subr.mxu0 0.0
  %1283 = vmatpush1.msra.mxu0 %v1273
  %1284 = vmatprep.subr.mxu0 0.0
  %1285 = vmatpush1.msra.mxu0 %v1274
  %1286 = vmatprep.subr.mxu0 0.0
  %1287 = vmatpush1.msra.mxu0 %v1275
  %1288 = vmatprep.subr.mxu0 0.0
  %1289 = vmatpush1.msra.mxu0 %v1276
  %1290 = vmatprep.subr.mxu0 0.0
  %1291 = vmatpush1.msra.mxu0 0.0
  %1292 = vmatprep.subr.mxu0 0.0
  %1293 = vmatpush1.msra.mxu0 0.0
  %1294 = vmatprep.subr.mxu0 0.0
  %1295 = vmatpush1.msra.mxu0 0.0
  %1296 = vmatprep.subr.mxu0 0.0
  %1297 = vmatpush1.msra.mxu0 0.0
  %1298 = vmatprep.subr.mxu0 0.0
  %1299 = vmatpush1.msra.mxu0 0.0
  %1300 = vmatprep.subr.mxu0 0.0
  %1301 = vmatpush1.msra.mxu0 0.0
  %1302 = vmatprep.subr.mxu0 0.0
  %1303 = vmatpush1.msra.mxu0 0.0
  %1304 = vmatprep.subr.mxu0 0.0
  %1305 = vmatpush1.msra.mxu0 0.0
  %1306 = vmatprep.subr.mxu0 0.0
  %1307 = vmatpush1.msra.mxu0 0.0
  %1308 = vmatprep.subr.mxu0 0.0
  %1309 = vmatpush1.msra.mxu0 0.0
  %1310 = vmatprep.subr.mxu0 0.0
  %1311 = vmatpush1.msra.mxu0 0.0
  %1312 = vmatprep.subr.mxu0 0.0
  %1313 = vmatpush1.msra.mxu0 0.0
  %1314 = vmatprep.subr.mxu0 0.0
  %1315 = vmatpush1.msra.mxu0 0.0
  %1316 = vmatprep.subr.mxu0 0.0
  %1317 = vmatpush1.msra.mxu0 0.0
  %1318 = vmatprep.subr.mxu0 0.0
  %1319 = vmatpush1.msra.mxu0 0.0
  %1320 = vmatprep.subr.mxu0 0.0
  %1321 = vmatpush1.msra.mxu0 0.0
  %1322 = vmatprep.subr.mxu0 0.0
  %1323 = vmatpush1.msra.mxu0 0.0
  %1324 = vmatprep.subr.mxu0 0.0
  %1325 = vmatpush1.msra.mxu0 0.0
  %1326 = vmatprep.subr.mxu0 0.0
  %1327 = vmatpush1.msra.mxu0 0.0
  %1328 = vmatprep.subr.mxu0 0.0
  %1329 = vmatpush1.msra.mxu0 0.0
  %1330 = vmatprep.subr.mxu0 0.0
  %1331 = vmatpush1.msra.mxu0 0.0
  %1332 = vmatprep.subr.mxu0 0.0
  %1333 = vmatpush1.msra.mxu0 0.0
  %1334 = vmatprep.subr.mxu0 0.0
  %1335 = vmatpush1.msra.mxu0 0.0
  %1336 = vmatprep.subr.mxu0 0.0
  %1337 = vmatpush1.msra.mxu0 0.0
  %1338 = vmatprep.subr.mxu0 0.0
  %1339 = vmatpush1.msra.mxu0 0.0
  %1340 = vmatprep.subr.mxu0 0.0
  %1341 = vmatpush1.msra.mxu0 0.0
  %1342 = vmatprep.subr.mxu0 0.0
  %1343 = vmatpush1.msra.mxu0 0.0
  %1344 = vmatprep.subr.mxu0 0.0
  %1345 = vmatpush1.msra.mxu0 0.0
  %1346 = vmatprep.mubr.f32.mxu0 0.0
  %1347 = vmatmul.mubr.f32.gmra.mrb[0].mxu0 %v1280
  %v1348 = vpop.f32.mrb[0].mxu0
  %v1349 = vadd.f32 %v39, %v1348
  %v1350 = vpop.f32.mrb[0].mxu0
  %1351 = vdwg.mxu0
  %v1352 = vxor.u32 %v1349, 2147483648
  %v1353 = vmul.f32 %v1352, 1.442695
  %v1354 = vpow.pop %v1353
  %v1355 = vadd.f32 %v1354, 1.0
  %v1356 = vrcp.pop %v1355
  %v1357 = vmul.f32 1.0, %v1356
  %1359 = vrot.lane.b32.xlu0 %v1357, 56
  %v1360 = vpop.permute.xlu0 %1359
  %vm1362 = vcmask 222400
  %1363 = vst.msk [vmem:[%s7] sm:$0x3] %vm1362, %v1360
  %v1364 = vld [vmem:[%s3] sm:$0xf]
  %1365 = vrot.lane.b32.xlu0 %v1357, 32
  %v1366 = vpop.permute.xlu0 %1365
  %v1367 = vsel %vm136, %v1366, 0
  %v1370 = vsel %vm140, %v1364, 0
  %1372 = vmatprep.subr.mxu0 0.0
  %1373 = vmatpush1.msra.mxu0 %v1370
  %1374 = vmatprep.subr.mxu0 0.0
  %1375 = vmatpush1.msra.mxu0 0.0
  %1376 = vmatprep.subr.mxu0 0.0
  %1377 = vmatpush1.msra.mxu0 0.0
  %1378 = vmatprep.subr.mxu0 0.0
  %1379 = vmatpush1.msra.mxu0 0.0
  %1380 = vmatprep.subr.mxu0 0.0
  %1381 = vmatpush1.msra.mxu0 0.0
  %1382 = vmatprep.subr.mxu0 0.0
  %1383 = vmatpush1.msra.mxu0 0.0
  %1384 = vmatprep.subr.mxu0 0.0
  %1385 = vmatpush1.msra.mxu0 0.0
  %1386 = vmatprep.subr.mxu0 0.0
  %1387 = vmatpush1.msra.mxu0 0.0
  %1388 = vmatprep.subr.mxu0 0.0
  %1389 = vmatpush1.msra.mxu0 0.0
  %1390 = vmatprep.subr.mxu0 0.0
  %1391 = vmatpush1.msra.mxu0 0.0
  %1392 = vmatprep.subr.mxu0 0.0
  %1393 = vmatpush1.msra.mxu0 0.0
  %1394 = vmatprep.subr.mxu0 0.0
  %1395 = vmatpush1.msra.mxu0 0.0
  %1396 = vmatprep.subr.mxu0 0.0
  %1397 = vmatpush1.msra.mxu0 0.0
  %1398 = vmatprep.subr.mxu0 0.0
  %1399 = vmatpush1.msra.mxu0 0.0
  %1400 = vmatprep.subr.mxu0 0.0
  %1401 = vmatpush1.msra.mxu0 0.0
  %1402 = vmatprep.subr.mxu0 0.0
  %1403 = vmatpush1.msra.mxu0 0.0
  %1404 = vmatprep.subr.mxu0 0.0
  %1405 = vmatpush1.msra.mxu0 0.0
  %1406 = vmatprep.subr.mxu0 0.0
  %1407 = vmatpush1.msra.mxu0 0.0
  %1408 = vmatprep.subr.mxu0 0.0
  %1409 = vmatpush1.msra.mxu0 0.0
  %1410 = vmatprep.subr.mxu0 0.0
  %1411 = vmatpush1.msra.mxu0 0.0
  %1412 = vmatprep.subr.mxu0 0.0
  %1413 = vmatpush1.msra.mxu0 0.0
  %1414 = vmatprep.subr.mxu0 0.0
  %1415 = vmatpush1.msra.mxu0 0.0
  %1416 = vmatprep.subr.mxu0 0.0
  %1417 = vmatpush1.msra.mxu0 0.0
  %1418 = vmatprep.subr.mxu0 0.0
  %1419 = vmatpush1.msra.mxu0 0.0
  %1420 = vmatprep.subr.mxu0 0.0
  %1421 = vmatpush1.msra.mxu0 0.0
  %1422 = vmatprep.subr.mxu0 0.0
  %1423 = vmatpush1.msra.mxu0 0.0
  %1424 = vmatprep.subr.mxu0 0.0
  %1425 = vmatpush1.msra.mxu0 0.0
  %1426 = vmatprep.subr.mxu0 0.0
  %1427 = vmatpush1.msra.mxu0 0.0
  %1428 = vmatprep.subr.mxu0 0.0
  %1429 = vmatpush1.msra.mxu0 0.0
  %1430 = vmatprep.subr.mxu0 0.0
  %1431 = vmatpush1.msra.mxu0 0.0
  %1432 = vmatprep.subr.mxu0 0.0
  %1433 = vmatpush1.msra.mxu0 0.0
  %1434 = vmatprep.subr.mxu0 0.0
  %1435 = vmatpush1.msra.mxu0 0.0
  %1436 = vmatprep.mubr.f32.mxu0 0.0
  %1437 = vmatmul.mubr.f32.gmra.mrb[0].mxu0 %v1367
  %v1438 = vpop.f32.mrb[0].mxu0
  %v1439 = vadd.f32 0.0, %v1438
  %v1440 = vpop.f32.mrb[0].mxu0
  %1441 = vdwg.mxu0
  %v1442 = vadd.f32 %v1439, %v1349
  %v1443 = vxor.u32 %v1442, 2147483648
  %v1444 = vmul.f32 %v1443, 1.442695
  %v1445 = vpow.pop %v1444
  %v1446 = vadd.f32 %v1445, 1.0
  %v1447 = vrcp.pop %v1446
  %v1448 = vmul.f32 1.0, %v1447
  %v1449 = vadd.f32 %v1439, %v222
  %1451 = vrot.lane.b32.xlu0 %v1349, 64
  %v1452 = vpop.permute.xlu0 %1451
  %v1454 = vmul.f32 %v1448, %v1452
  %1456 = vrot.lane.b32.xlu0 %v1454, 64
  %v1457 = vpop.permute.xlu0 %1456
  %v1459 = vadd.f32 %v1449, %v1457
  %v1460 = vtanh.pop %v1459
  %v1461 = vsub.f32 1.0, %v1448
  %1463 = vrot.lane.b32.xlu0 %v1460, 96
  %v1464 = vpop.permute.xlu0 %1463
  %v1466 = vmul.f32 %v1461, %v1464
  %v1467 = vmul.f32 %v1448, %v1271
  %v1468 = vadd.f32 %v1466, %v1467
  %v1471 = vunpack.c.l.s4 1983009808
  %v1472 = vunpack.c.0.s8 %v1471
  %v1473 = vlaneseq
  %v1474 = vshrl.u32 %v1473, 7
  %v1475 = vsub.s32 %v1472, %v1474
  %v1476 = vrot.slane %v1468, %v1475
  %1477 = vrot.lane.b32.xlu0 %v1476, 32
  %v1478 = vpop.permute.xlu0 %1477
  %1480 = vst.msk [vmem:[%s8 + $0x2] sm:$0x3] %vm660, %v1478
  %v1481 = vld [vmem:[%s5] sm:$0xff]
  %v1482 = vld [vmem:[%s5 + $0x8] sm:$0xff]
  %v1483 = vld [vmem:[%s5 + $0x10] sm:$0xff]
  %v1484 = vld [vmem:[%s5 + $0x18] sm:$0xff]
  %1485 = vrot.lane.b32.xlu0 %v1468, 96
  %v1486 = vpop.permute.xlu0 %1485
  %v1487 = vsel %vm53, %v1486, 0
  %1489 = vmatprep.subr.mxu0 0.0
  %1490 = vmatpush1.msra.mxu0 %v1481
  %1491 = vmatprep.subr.mxu0 0.0
  %1492 = vmatpush1.msra.mxu0 %v1482
  %1493 = vmatprep.subr.mxu0 0.0
  %1494 = vmatpush1.msra.mxu0 %v1483
  %1495 = vmatprep.subr.mxu0 0.0
  %1496 = vmatpush1.msra.mxu0 %v1484
  %1497 = vmatprep.subr.mxu0 0.0
  %1498 = vmatpush1.msra.mxu0 0.0
  %1499 = vmatprep.subr.mxu0 0.0
  %1500 = vmatpush1.msra.mxu0 0.0
  %1501 = vmatprep.subr.mxu0 0.0
  %1502 = vmatpush1.msra.mxu0 0.0
  %1503 = vmatprep.subr.mxu0 0.0
  %1504 = vmatpush1.msra.mxu0 0.0
  %1505 = vmatprep.subr.mxu0 0.0
  %1506 = vmatpush1.msra.mxu0 0.0
  %1507 = vmatprep.subr.mxu0 0.0
  %1508 = vmatpush1.msra.mxu0 0.0
  %1509 = vmatprep.subr.mxu0 0.0
  %1510 = vmatpush1.msra.mxu0 0.0
  %1511 = vmatprep.subr.mxu0 0.0
  %1512 = vmatpush1.msra.mxu0 0.0
  %1513 = vmatprep.subr.mxu0 0.0
  %1514 = vmatpush1.msra.mxu0 0.0
  %1515 = vmatprep.subr.mxu0 0.0
  %1516 = vmatpush1.msra.mxu0 0.0
  %1517 = vmatprep.subr.mxu0 0.0
  %1518 = vmatpush1.msra.mxu0 0.0
  %1519 = vmatprep.subr.mxu0 0.0
  %1520 = vmatpush1.msra.mxu0 0.0
  %1521 = vmatprep.subr.mxu0 0.0
  %1522 = vmatpush1.msra.mxu0 0.0
  %1523 = vmatprep.subr.mxu0 0.0
  %1524 = vmatpush1.msra.mxu0 0.0
  %1525 = vmatprep.subr.mxu0 0.0
  %1526 = vmatpush1.msra.mxu0 0.0
  %1527 = vmatprep.subr.mxu0 0.0
  %1528 = vmatpush1.msra.mxu0 0.0
  %1529 = vmatprep.subr.mxu0 0.0
  %1530 = vmatpush1.msra.mxu0 0.0
  %1531 = vmatprep.subr.mxu0 0.0
  %1532 = vmatpush1.msra.mxu0 0.0
  %1533 = vmatprep.subr.mxu0 0.0
  %1534 = vmatpush1.msra.mxu0 0.0
  %1535 = vmatprep.subr.mxu0 0.0
  %1536 = vmatpush1.msra.mxu0 0.0
  %1537 = vmatprep.subr.mxu0 0.0
  %1538 = vmatpush1.msra.mxu0 0.0
  %1539 = vmatprep.subr.mxu0 0.0
  %1540 = vmatpush1.msra.mxu0 0.0
  %1541 = vmatprep.subr.mxu0 0.0
  %1542 = vmatpush1.msra.mxu0 0.0
  %1543 = vmatprep.subr.mxu0 0.0
  %1544 = vmatpush1.msra.mxu0 0.0
  %1545 = vmatprep.subr.mxu0 0.0
  %1546 = vmatpush1.msra.mxu0 0.0
  %1547 = vmatprep.subr.mxu0 0.0
  %1548 = vmatpush1.msra.mxu0 0.0
  %1549 = vmatprep.subr.mxu0 0.0
  %1550 = vmatpush1.msra.mxu0 0.0
  %1551 = vmatprep.subr.mxu0 0.0
  %1552 = vmatpush1.msra.mxu0 0.0
  %1553 = vmatprep.mubr.f32.mxu0 0.0
  %1554 = vmatmul.mubr.f32.gmra.mrb[0].mxu0 %v1487
  %v1555 = vpop.f32.mrb[0].mxu0
  %v1556 = vadd.f32 %v39, %v1555
  %v1557 = vpop.f32.mrb[0].mxu0
  %1558 = vdwg.mxu0
  %v1559 = vxor.u32 %v1556, 2147483648
  %v1560 = vmul.f32 %v1559, 1.442695
  %v1561 = vpow.pop %v1560
  %v1562 = vadd.f32 %v1561, 1.0
  %v1563 = vrcp.pop %v1562
  %v1564 = vmul.f32 1.0, %v1563
  %1566 = vrot.lane.b32.xlu0 %v1564, 60
  %v1567 = vpop.permute.xlu0 %1566
  %vm1569 = vcmask 255200
  %1570 = vst.msk [vmem:[%s7] sm:$0x3] %vm1569, %v1567
  %v1571 = vld [vmem:[%s3] sm:$0xf]
  %1572 = vrot.lane.b32.xlu0 %v1564, 32
  %v1573 = vpop.permute.xlu0 %1572
  %v1574 = vsel %vm136, %v1573, 0
  %v1577 = vsel %vm140, %v1571, 0
  %1579 = vmatprep.subr.mxu0 0.0
  %1580 = vmatpush1.msra.mxu0 %v1577
  %1581 = vmatprep.subr.mxu0 0.0
  %1582 = vmatpush1.msra.mxu0 0.0
  %1583 = vmatprep.subr.mxu0 0.0
  %1584 = vmatpush1.msra.mxu0 0.0
  %1585 = vmatprep.subr.mxu0 0.0
  %1586 = vmatpush1.msra.mxu0 0.0
  %1587 = vmatprep.subr.mxu0 0.0
  %1588 = vmatpush1.msra.mxu0 0.0
  %1589 = vmatprep.subr.mxu0 0.0
  %1590 = vmatpush1.msra.mxu0 0.0
  %1591 = vmatprep.subr.mxu0 0.0
  %1592 = vmatpush1.msra.mxu0 0.0
  %1593 = vmatprep.subr.mxu0 0.0
  %1594 = vmatpush1.msra.mxu0 0.0
  %1595 = vmatprep.subr.mxu0 0.0
  %1596 = vmatpush1.msra.mxu0 0.0
  %1597 = vmatprep.subr.mxu0 0.0
  %1598 = vmatpush1.msra.mxu0 0.0
  %1599 = vmatprep.subr.mxu0 0.0
  %1600 = vmatpush1.msra.mxu0 0.0
  %1601 = vmatprep.subr.mxu0 0.0
  %1602 = vmatpush1.msra.mxu0 0.0
  %1603 = vmatprep.subr.mxu0 0.0
  %1604 = vmatpush1.msra.mxu0 0.0
  %1605 = vmatprep.subr.mxu0 0.0
  %1606 = vmatpush1.msra.mxu0 0.0
  %1607 = vmatprep.subr.mxu0 0.0
  %1608 = vmatpush1.msra.mxu0 0.0
  %1609 = vmatprep.subr.mxu0 0.0
  %1610 = vmatpush1.msra.mxu0 0.0
  %1611 = vmatprep.subr.mxu0 0.0
  %1612 = vmatpush1.msra.mxu0 0.0
  %1613 = vmatprep.subr.mxu0 0.0
  %1614 = vmatpush1.msra.mxu0 0.0
  %1615 = vmatprep.subr.mxu0 0.0
  %1616 = vmatpush1.msra.mxu0 0.0
  %1617 = vmatprep.subr.mxu0 0.0
  %1618 = vmatpush1.msra.mxu0 0.0
  %1619 = vmatprep.subr.mxu0 0.0
  %1620 = vmatpush1.msra.mxu0 0.0
  %1621 = vmatprep.subr.mxu0 0.0
  %1622 = vmatpush1.msra.mxu0 0.0
  %1623 = vmatprep.subr.mxu0 0.0
  %1624 = vmatpush1.msra.mxu0 0.0
  %1625 = vmatprep.subr.mxu0 0.0
  %1626 = vmatpush1.msra.mxu0 0.0
  %1627 = vmatprep.subr.mxu0 0.0
  %1628 = vmatpush1.msra.mxu0 0.0
  %1629 = vmatprep.subr.mxu0 0.0
  %1630 = vmatpush1.msra.mxu0 0.0
  %1631 = vmatprep.subr.mxu0 0.0
  %1632 = vmatpush1.msra.mxu0 0.0
  %1633 = vmatprep.subr.mxu0 0.0
  %1634 = vmatpush1.msra.mxu0 0.0
  %1635 = vmatprep.subr.mxu0 0.0
  %1636 = vmatpush1.msra.mxu0 0.0
  %1637 = vmatprep.subr.mxu0 0.0
  %1638 = vmatpush1.msra.mxu0 0.0
  %1639 = vmatprep.subr.mxu0 0.0
  %1640 = vmatpush1.msra.mxu0 0.0
  %1641 = vmatprep.subr.mxu0 0.0
  %1642 = vmatpush1.msra.mxu0 0.0
  %1643 = vmatprep.mubr.f32.mxu0 0.0
  %1644 = vmatmul.mubr.f32.gmra.mrb[0].mxu0 %v1574
  %v1645 = vpop.f32.mrb[0].mxu0
  %v1646 = vadd.f32 0.0, %v1645
  %v1647 = vpop.f32.mrb[0].mxu0
  %1648 = vdwg.mxu0
  %v1649 = vadd.f32 %v1646, %v1556
  %v1650 = vxor.u32 %v1649, 2147483648
  %v1651 = vmul.f32 %v1650, 1.442695
  %v1652 = vpow.pop %v1651
  %v1653 = vadd.f32 %v1652, 1.0
  %v1654 = vrcp.pop %v1653
  %v1655 = vmul.f32 1.0, %v1654
  %v1656 = vadd.f32 %v1646, %v222
  %1658 = vrot.lane.b32.xlu0 %v1556, 64
  %v1659 = vpop.permute.xlu0 %1658
  %v1661 = vmul.f32 %v1655, %v1659
  %1663 = vrot.lane.b32.xlu0 %v1661, 64
  %v1664 = vpop.permute.xlu0 %1663
  %v1666 = vadd.f32 %v1656, %v1664
  %v1667 = vtanh.pop %v1666
  %v1668 = vsub.f32 1.0, %v1655
  %1670 = vrot.lane.b32.xlu0 %v1667, 96
  %v1671 = vpop.permute.xlu0 %1670
  %v1673 = vmul.f32 %v1668, %v1671
  %v1674 = vmul.f32 %v1655, %v1468
  %v1675 = vadd.f32 %v1673, %v1674
  %v1678 = vunpack.c.l.s4 1983009808
  %v1679 = vunpack.c.0.s8 %v1678
  %v1680 = vlaneseq
  %v1681 = vshrl.u32 %v1680, 7
  %v1682 = vsub.s32 %v1679, %v1681
  %v1683 = vrot.slane %v1675, %v1682
  %1684 = vrot.lane.b32.xlu0 %v1683, 64
  %v1685 = vpop.permute.xlu0 %1684
  %1687 = vst.msk [vmem:[%s8 + $0x2] sm:$0x3] %vm868, %v1685
  // Predicated region
  $region30: #{gru_forward.1} parent=0 // pred_check
    _
  $region31: #{gru_forward.1} parent=0 // pred_check_branch
    %1689 = sbr.rel (0) target = $region33
  $region32: #{gru_forward.1} parent=0 // pred_region
    _
  $region33: #{gru_forward.1} parent=0 // pred_fallthru
    _
  // Predicated region
  $region34: #{gru_forward.1} parent=0 // pred_check
    _
  $region35: #{gru_forward.1} parent=0 // pred_check_branch
    %1691 = sbr.rel (0) target = $region37
  $region36: #{gru_forward.1} parent=0 // pred_region
    _
  $region37: #{gru_forward.1} parent=0 // pred_fallthru
    _
  // Predicated region
  $region38: #{gru_forward.1} parent=0 // pred_check
    _
  $region39: #{gru_forward.1} parent=0 // pred_check_branch
    %1693 = sbr.rel (0) target = $region41
  $region40: #{gru_forward.1} parent=0 // pred_region
    _
  $region41: #{gru_forward.1} parent=0 // pred_fallthru
    _
  // Predicated region
  $region42: #{gru_forward.1} parent=0 // pred_check
    _
  $region43: #{gru_forward.1} parent=0 // pred_check_branch
    %1695 = sbr.rel (0) target = $region45
  $region44: #{gru_forward.1} parent=0 // pred_region
    _
  $region45: #{gru_forward.1} parent=0 // pred_fallthru
    _

</llo_original>
